<compile_context>
chip_gen: v7x
topology: tpu7x:2x2x1
jax: 0.10.0
libtpu: 0.0.40
codegen_flags: <defaults>
</compile_context>

<pallas_src>
import jax
import jax.numpy as jnp
from jax.experimental import pallas as pl
from jax.experimental.pallas import tpu as pltpu


_LANE = 128
_MAX_SPATIAL_TILE = 64 * 1024                   # lanes per step (multiple of 128)
_VMEM_WORKING_SET_BUDGET = 16 * 1024 * 1024     # double-buffered bytes per grid step
_VMEM_LIMIT_BYTES = 32 * 1024 * 1024            # scoped VMEM ceiling (safe on v5e/v6e/v7x)
_XLA_FALLBACK_BYTES = 512 * 1024                # below this, XLA's fused reduce wins
_TARGET_PARALLEL_STEPS = 2                      # >= 2 balanced steps for v7x megacore


def _round_up(x: int, m: int) -> int:
    return (x + m - 1) // m * m


def _sublane_pack(dtype) -> int:
    # Sublane packing group: 8 rows for 4-byte, 16 for 2-byte, 32 for 1-byte dtypes.
    return max(8, 32 // jnp.dtype(dtype).itemsize)


def _l1_mean_c_kernel(pred_ref, gt_ref, out_ref):
    """pred_ref / gt_ref: (B, C, T) VMEM tiles; out_ref: (B, T).  out = mean_C |pred - gt|."""
    _, c_dim, _ = pred_ref.shape
    inv_c = 1.0 / float(c_dim)                 # compile-time constant: multiply, don't divide
    c_chunk = _sublane_pack(pred_ref.dtype)    # one packed sublane group per chunk

    # Chunked channel reduction: live f32 temporaries are bounded to one sublane
    # group plus the (B, T) accumulator regardless of C.  The axis=1 sum is a
    # sublane (XLU) reduce, an otherwise-idle slot in this HBM-bound kernel.
    acc = None
    for c0 in range(0, c_dim, c_chunk):
        c1 = min(c0 + c_chunk, c_dim)
        p = pred_ref[:, c0:c1, :].astype(jnp.float32)   # cast fused into the subtract
        g = gt_ref[:, c0:c1, :].astype(jnp.float32)
        part = jnp.sum(jnp.abs(p - g), axis=1)
        acc = part if acc is None else acc + part

    out_ref[...] = (acc * inv_c).astype(out_ref.dtype)


def _l1_loss_xla(pred_img: jax.Array, gt_img: jax.Array) -> jax.Array:
    return jnp.mean(jnp.abs(pred_img - gt_img), axis=1)


def l1_loss_wrapper(pred_img: jax.Array, gt_img: jax.Array) -> jax.Array:
    """Equivalent of torch.mean(torch.abs(pred_img - gt_img), dim=1) for NCHW inputs."""
    assert pred_img.shape == gt_img.shape
    assert pred_img.dtype == gt_img.dtype
    B, C, H, W = pred_img.shape
    HW = H * W
    itemsize = jnp.dtype(pred_img.dtype).itemsize

    # Tiny-problem fallback: one grid step, Pallas launch/pipeline overhead dominates.
    total_in_bytes = 2 * B * C * HW * itemsize
    if total_in_bytes < _XLA_FALLBACK_BYTES or HW <= _LANE:
        # TODO(synk): huge-B*C / tiny-spatial shapes also take this path; a
        # batch-tiled Pallas variant would be needed to cover them.
        return _l1_loss_xla(pred_img, gt_img)

    # --- VMEM accounting: real itemsize, sublane padding, both pipeline buffers ---
    pack = _sublane_pack(pred_img.dtype)
    c_pad = _round_up(C, pack)                       # input channel rows pad to a pack
    out_rows = _round_up(B, pack)                    # output batch rows pad to a pack
    per_lane_bytes = (2 * 2 * B * c_pad * itemsize   # 2 inputs x 2 pipeline buffers
                      + 2 * out_rows * itemsize)     # 2 output buffers
    t_budget = (_VMEM_WORKING_SET_BUDGET // per_lane_bytes) // _LANE * _LANE
    if t_budget < _LANE:
        return _l1_loss_xla(pred_img, gt_img)        # B*C too large to tile spatially

    # --- Spatial tiling: 128-aligned, >= 2 roughly balanced steps (v7x megacore) ---
    hw_lanes = _round_up(HW, _LANE)
    balanced_tile = _round_up(pl.cdiv(hw_lanes, _TARGET_PARALLEL_STEPS), _LANE)
    tile_hw = max(_LANE, min(t_budget, _MAX_SPATIAL_TILE, balanced_tile))
    grid = (pl.cdiv(HW, tile_hw),)                   # ragged last tile masked by Pallas

    pred2 = pred_img.reshape(B, C, HW)
    gt2 = gt_img.reshape(B, C, HW)

    out = pl.pallas_call(
        _l1_mean_c_kernel,
        out_shape=jax.ShapeDtypeStruct((B, HW), pred_img.dtype),
        grid_spec=pltpu.PrefetchScalarGridSpec(
            num_scalar_prefetch=0,
            grid=grid,
            in_specs=[
                pl.BlockSpec((B, C, tile_hw), lambda s: (0, 0, s)),
                pl.BlockSpec((B, C, tile_hw), lambda s: (0, 0, s)),
            ],
            out_specs=pl.BlockSpec((B, tile_hw), lambda s: (0, s)),
        ),
        compiler_params=pltpu.CompilerParams(
            dimension_semantics=("parallel",),
            vmem_limit_bytes=_VMEM_LIMIT_BYTES,
        ),
    )(pred2, gt2)

    return out.reshape(B, H, W)


if __name__ == "__main__":
    key = jax.random.PRNGKey(0)

    def _run_case(key, shape, dtype, atol, rtol):
        k1, k2 = jax.random.split(key)
        pred = jax.random.normal(k1, shape, dtype=jnp.float32).astype(dtype)
        gt = jax.random.normal(k2, shape, dtype=jnp.float32).astype(dtype)
        out = jax.block_until_ready(l1_loss_wrapper(pred, gt))
        ref = jnp.mean(jnp.abs(pred.astype(jnp.float32) - gt.astype(jnp.float32)), axis=1)
        assert out.shape == shape[:1] + shape[2:], (out.shape, shape)
        assert jnp.allclose(out.astype(jnp.float32), ref, atol=atol, rtol=rtol), shape
        return jax.random.fold_in(key, 1)

    # Small shape implied by the module (takes the XLA fast path; same semantics).
    key = _run_case(key, (2, 4, 16, 16), jnp.float32, 1e-5, 1e-5)
    # Pallas path: chunked channel reduction (C > 8), two balanced spatial tiles.
    key = _run_case(key, (2, 12, 64, 96), jnp.float32, 1e-5, 1e-5)
    # Pallas path: H*W not a multiple of 128 (masked edge tile), B not a multiple of 8.
    key = _run_case(key, (3, 5, 60, 100), jnp.float32, 1e-5, 1e-5)
    # Pallas path: bf16 inputs, f32 accumulation, chunking over 16-row sublane groups.
    key = _run_case(key, (2, 20, 64, 128), jnp.bfloat16, 2e-2, 2e-2)

    print("KERNEL_OK")
</pallas_src>

<mosaic_0001>
module attributes {stable_mosaic.version = 11 : i64} {
  func.func @_l1_mean_c_kernel(%arg0: i32, %arg1: memref<2x12x3072xf32, #tpu.memory_space<vmem>>, %arg2: memref<2x12x3072xf32, #tpu.memory_space<vmem>>, %arg3: memref<2x3072xf32, #tpu.memory_space<vmem>>) attributes {dimension_semantics = [#tpu.dimension_semantics<parallel>], iteration_bounds = array<i64: 2>, scalar_prefetch = 0 : i64, scratch_operands = 0 : i64, tpu.core_type = #tpu.core_type<tc>, window_params = [{transform_indices = @transform_0, window_bounds = array<i64: 2, 12, 3072>}, {transform_indices = @transform_1, window_bounds = array<i64: 2, 12, 3072>}, {transform_indices = @transform_2, window_bounds = array<i64: 2, 3072>}]} {
    %c0 = arith.constant 0 : index
    %c0_0 = arith.constant 0 : index
    %c0_1 = arith.constant 0 : index
    %0 = vector.load %arg1[%c0, %c0_0, %c0_1] : memref<2x12x3072xf32, #tpu.memory_space<vmem>>, vector<2x8x3072xf32>
    %c0_2 = arith.constant 0 : index
    %c0_3 = arith.constant 0 : index
    %c0_4 = arith.constant 0 : index
    %1 = vector.load %arg2[%c0_2, %c0_3, %c0_4] : memref<2x12x3072xf32, #tpu.memory_space<vmem>>, vector<2x8x3072xf32>
    %2 = arith.subf %0, %1 : vector<2x8x3072xf32>
    %3 = math.absf %2 : vector<2x8x3072xf32>
    %cst = arith.constant dense<0.000000e+00> : vector<2x3072xf32>
    %4 = vector.multi_reduction <add>, %3, %cst [1] : vector<2x8x3072xf32> to vector<2x3072xf32>
    %c0_5 = arith.constant 0 : index
    %c8 = arith.constant 8 : index
    %c0_6 = arith.constant 0 : index
    %5 = vector.load %arg1[%c0_5, %c8, %c0_6] : memref<2x12x3072xf32, #tpu.memory_space<vmem>>, vector<2x4x3072xf32>
    %c0_7 = arith.constant 0 : index
    %c8_8 = arith.constant 8 : index
    %c0_9 = arith.constant 0 : index
    %6 = vector.load %arg2[%c0_7, %c8_8, %c0_9] : memref<2x12x3072xf32, #tpu.memory_space<vmem>>, vector<2x4x3072xf32>
    %7 = arith.subf %5, %6 : vector<2x4x3072xf32>
    %8 = math.absf %7 : vector<2x4x3072xf32>
    %cst_10 = arith.constant dense<0.000000e+00> : vector<2x3072xf32>
    %9 = vector.multi_reduction <add>, %8, %cst_10 [1] : vector<2x4x3072xf32> to vector<2x3072xf32>
    %10 = arith.addf %4, %9 : vector<2x3072xf32>
    %cst_11 = arith.constant 0.0833333358 : f32
    %11 = vector.broadcast %cst_11 : f32 to vector<2x3072xf32>
    %12 = arith.mulf %10, %11 : vector<2x3072xf32>
    %c0_12 = arith.constant 0 : index
    %c0_13 = arith.constant 0 : index
    %13 = vector.load %arg3[%c0_12, %c0_13] : memref<2x3072xf32, #tpu.memory_space<vmem>>, vector<2x3072xf32>
    tpu.vector_store %arg3[%c0_12, %c0_13], %12 {strides = array<i32>} : memref<2x3072xf32, #tpu.memory_space<vmem>>, vector<2x3072xf32>,
    return
  }
  func.func @transform_0(%arg0: i32) -> (i32, i32, i32) {
    %c0_i32 = arith.constant 0 : i32
    %c0_i32_0 = arith.constant 0 : i32
    %c0_i32_1 = arith.constant 0 : i32
    return %c0_i32, %c0_i32_0, %arg0 : i32, i32, i32
  }
  func.func @transform_1(%arg0: i32) -> (i32, i32, i32) {
    %c0_i32 = arith.constant 0 : i32
    %c0_i32_0 = arith.constant 0 : i32
    %c0_i32_1 = arith.constant 0 : i32
    return %c0_i32, %c0_i32_0, %arg0 : i32, i32, i32
  }
  func.func @transform_2(%arg0: i32) -> (i32, i32) {
    %c0_i32 = arith.constant 0 : i32
    %c0_i32_0 = arith.constant 0 : i32
    return %c0_i32, %arg0 : i32, i32
  }
}

</mosaic_0001>

<llo_original>
// kernel: tpu_custom_call.1
$region0: #{tpu_custom_call.1}
  #allocation0 [shape = 'u32[]', space=smem, size = 0x4, offset = 0x4, fixed_abs, tag = 'smem constant byte address 0x4 - core index']
  #allocation1 [shape = 'u32[144,128]{1,0:T(1,128)}', space=vmem, size = 0x12000, scoped, tag = 'internal scratch']
  %s0 = inlined_call_operand.vmem [shape: f32[2,12,6144], index: 0, kind: input, shape index: {}]
  %s1 = inlined_call_operand.vmem [shape: f32[2,12,6144], index: 1, kind: input, shape index: {}]
  %s2 = inlined_call_operand.hbm [shape: f32[2,6144], index: 2, kind: output, shape index: {}]
  %s3 = sld [smem:[#allocation0]]
  $region87: #{tpu_custom_call.1} parent=0
    _
  %s5 = ssub.s32 1, %s3
  %s6 = scalar_select 0, %s5, %s3
  $region1: #{tpu_custom_call.1} parent=0
    #allocation2 [shape = 'u8[786432]{0}', space=vmem, size = 0xc0000, scoped, tag = 'input window, operand 0']
    #allocation3 [shape = 'u8[786432]{0}', space=vmem, size = 0xc0000, scoped, tag = 'input window, operand 1']
    #allocation4 [shape = 'u8[49152]{0}', space=vmem, size = 0xc000, scoped, tag = 'output window, operand 0']
    #allocation5 [shape = 's32[2]{0}', space=sflag, size = 0x8, scoped, tag = 'scoped memory for tpu_custom_call.1']
    %7 = vsyncpa [#allocation5], 0
    %s8 = scalar_lea.sflag [#allocation5], 1
    %9 = vsyncpa %s8, 0
    loop: start=0, step=1, limit=4
    $region2: #{tpu_custom_call.1} parent=1 // loop_pre_header
      _
    $region3: #{tpu_custom_call.1} parent=1 // loop_header
      %s11 = sphi 0, %s15
      %p12 = scmp.ge.s32.totalorder %s11, 4
      %s21 = sphi 0, %s23
      %s24 = sphi 0, %s21
      %s25 = sphi 0, %s24
      %s41 = sphi 0, %s25
      %s47 = sphi 0, %s49
      %s50 = sphi 0, %s47
      %s51 = sphi 0, %s50
      %s67 = sphi 0, %s51
      %s73 = sphi 0, %s75
      %s76 = sphi 0, %s73
      %s77 = sphi 0, %s76
      %s93 = sphi 0, %s77
    $region4: #{tpu_custom_call.1} parent=1 // loop_header_branch
      %14 = sbr.rel (%p12) target = $region8
    $region5: #{tpu_custom_call.1} parent=1 // loop_body
      %s16 = ssub.s32 %s11, 1
      %s17 = ssub.s32 %s11, 2
      %s18 = sadd.s32 %s11, 1
      %s19 = ssub.s32 %s11, %s18
      %p20 = scmp.eq.s32.totalorder %s19, 0
      %s22 = sadd.s32 %s21, 1
      %s23 = scalar_select %p20, %s21, %s22
      %p26 = pneg %p20
      %p27 = scmp.eq.s32.totalorder %s11, 1
      %p28 = por %p26, %p27
      %p29 = scmp.ne.s32.totalorder %s21, %s24
      %p30 = scmp.eq.s32.totalorder %s11, 0
      %p31 = por %p29, %p30
      %p32 = scmp.ne.s32.totalorder %s21, %s24
      %p33 = scmp.eq.s32.totalorder %s16, 1
      %p34 = por %p32, %p33
      %p35 = scmp.ne.s32.totalorder %s24, %s25
      %p36 = scmp.eq.s32.totalorder %s16, 0
      %p37 = por %p35, %p36
      %p38 = scmp.ne.s32.totalorder %s24, %s25
      %p39 = scmp.eq.s32.totalorder %s17, 1
      %p40 = por %p38, %p39
      %p42 = scmp.ne.s32.totalorder %s25, %s41
      %p43 = scmp.eq.s32.totalorder %s17, 0
      %p44 = por %p42, %p43
      %s45 = ssub.s32 %s11, %s18
      %p46 = scmp.eq.s32.totalorder %s45, 0
      %s48 = sadd.s32 %s47, 1
      %s49 = scalar_select %p46, %s47, %s48
      %p52 = pneg %p46
      %p53 = scmp.eq.s32.totalorder %s11, 1
      %p54 = por %p52, %p53
      %p55 = scmp.ne.s32.totalorder %s47, %s50
      %p56 = scmp.eq.s32.totalorder %s11, 0
      %p57 = por %p55, %p56
      %p58 = scmp.ne.s32.totalorder %s47, %s50
      %p59 = scmp.eq.s32.totalorder %s16, 1
      %p60 = por %p58, %p59
      %p61 = scmp.ne.s32.totalorder %s50, %s51
      %p62 = scmp.eq.s32.totalorder %s16, 0
      %p63 = por %p61, %p62
      %p64 = scmp.ne.s32.totalorder %s50, %s51
      %p65 = scmp.eq.s32.totalorder %s17, 1
      %p66 = por %p64, %p65
      %p68 = scmp.ne.s32.totalorder %s51, %s67
      %p69 = scmp.eq.s32.totalorder %s17, 0
      %p70 = por %p68, %p69
      %s71 = ssub.s32 %s11, %s18
      %p72 = scmp.eq.s32.totalorder %s71, 0
      %s74 = sadd.s32 %s73, 1
      %s75 = scalar_select %p72, %s73, %s74
      %p78 = pneg %p72
      %p79 = scmp.eq.s32.totalorder %s11, 1
      %p80 = por %p78, %p79
      %p81 = scmp.ne.s32.totalorder %s73, %s76
      %p82 = scmp.eq.s32.totalorder %s11, 0
      %p83 = por %p81, %p82
      %p84 = scmp.ne.s32.totalorder %s73, %s76
      %p85 = scmp.eq.s32.totalorder %s16, 1
      %p86 = por %p84, %p85
      %p87 = scmp.ne.s32.totalorder %s76, %s77
      %p88 = scmp.eq.s32.totalorder %s16, 0
      %p89 = por %p87, %p88
      %p90 = scmp.ne.s32.totalorder %s76, %s77
      %p91 = scmp.eq.s32.totalorder %s17, 1
      %p92 = por %p90, %p91
      %p94 = scmp.ne.s32.totalorder %s77, %s93
      %p95 = scmp.eq.s32.totalorder %s17, 0
      %p96 = por %p94, %p95
      %p97 = scmp.le.s32.totalorder 1, %s11
      %p98 = scmp.lt.s32.totalorder %s11, 3
      %p99 = pnand %p97, %p98
      %p100 = pneg %p99
      // Predicated region
      $region9: #{tpu_custom_call.1} parent=5 // pred_check
        _
      $region10: #{tpu_custom_call.1} parent=5 // pred_check_branch
        %102 = sbr.rel (%p99) target = $region12
      $region11: #{tpu_custom_call.1} parent=5 // pred_region
        %s103 = ssub.s32 %s11, 1
      $region12: #{tpu_custom_call.1} parent=5 // pred_fallthru
        _
      %p104 = scmp.lt.s32.totalorder %s11, 2
      // Predicated region
      $region13: #{tpu_custom_call.1} parent=5 // pred_check
        %p105 = pneg %p104
      $region14: #{tpu_custom_call.1} parent=5 // pred_check_branch
        %107 = sbr.rel (%p105) target = $region16
      $region15: #{tpu_custom_call.1} parent=5 // pred_region
        // Predicated region
        $region17: #{tpu_custom_call.1} parent=15 // pred_check
          %p108 = pneg %p31
        $region18: #{tpu_custom_call.1} parent=15 // pred_check_branch
          %110 = sbr.rel (%p108) target = $region20
        $region19: #{tpu_custom_call.1} parent=15 // pred_region
          %s111 = sand.u32 %s21, 1
          %s112 = sand.u32 %s21, 1
          %s113 = smul.addr %s112, 768
          %s114 = scalar_lea.vmem [#allocation2], %s113
          %s115 = smul.u32 24, %s11
          %s116 = smul.addr %s115, 8
          %s117 = scalar_lea.vmem %s0, %s116
          // Predicated region
          $region21: #{tpu_custom_call.1} parent=19 // pred_check
            _
          $region22: #{tpu_custom_call.1} parent=19 // pred_check_branch
            %119 = sbr.rel (0) target = $region24
          $region23: #{tpu_custom_call.1} parent=19 // pred_region
            // Predicated region
            $region25: #{tpu_custom_call.1} parent=23 // pred_check
              _
            $region26: #{tpu_custom_call.1} parent=23 // pred_check_branch
              %121 = sbr.rel (0) target = $region28
            $region27: #{tpu_custom_call.1} parent=23 // pred_region
              loop: start=0, step=1, limit=1
              $region29: #{tpu_custom_call.1} parent=27 // loop_pre_header
                _
              $region30: #{tpu_custom_call.1} parent=27 // loop_header
                %s123 = sphi 0, %s127
                %p124 = scmp.ge.s32.totalorder %s123, 1
                %s128 = sphi %s117, %s117
                %s129 = sphi %s114, %s114
              $region31: #{tpu_custom_call.1} parent=27 // loop_header_branch
                %126 = sbr.rel (%p124) target = $region35
              $region32: #{tpu_custom_call.1} parent=27 // loop_body
                %v130 = vld [vmem:[%s128] sm:$0xff]
                %131 = vst [vmem:[%s129] sm:$0xff] %v130
                %v132 = vld [vmem:[%s128 + $0x8] sm:$0xff]
                %133 = vst [vmem:[%s129 + $0x8] sm:$0xff] %v132
                %v134 = vld [vmem:[%s128 + $0x10] sm:$0xff]
                %135 = vst [vmem:[%s129 + $0x10] sm:$0xff] %v134
                %v136 = vld [vmem:[%s128 + $0x18] sm:$0xff]
                %137 = vst [vmem:[%s129 + $0x18] sm:$0xff] %v136
                %v138 = vld [vmem:[%s128 + $0x20] sm:$0xff]
                %139 = vst [vmem:[%s129 + $0x20] sm:$0xff] %v138
                %v140 = vld [vmem:[%s128 + $0x28] sm:$0xff]
                %141 = vst [vmem:[%s129 + $0x28] sm:$0xff] %v140
                %v142 = vld [vmem:[%s128 + $0x30] sm:$0xff]
                %143 = vst [vmem:[%s129 + $0x30] sm:$0xff] %v142
                %v144 = vld [vmem:[%s128 + $0x38] sm:$0xff]
                %145 = vst [vmem:[%s129 + $0x38] sm:$0xff] %v144
                %v146 = vld [vmem:[%s128 + $0x40] sm:$0xff]
                %147 = vst [vmem:[%s129 + $0x40] sm:$0xff] %v146
                %v148 = vld [vmem:[%s128 + $0x48] sm:$0xff]
                %149 = vst [vmem:[%s129 + $0x48] sm:$0xff] %v148
                %v150 = vld [vmem:[%s128 + $0x50] sm:$0xff]
                %151 = vst [vmem:[%s129 + $0x50] sm:$0xff] %v150
                %v152 = vld [vmem:[%s128 + $0x58] sm:$0xff]
                %153 = vst [vmem:[%s129 + $0x58] sm:$0xff] %v152
                %v154 = vld [vmem:[%s128 + $0x60] sm:$0xff]
                %155 = vst [vmem:[%s129 + $0x60] sm:$0xff] %v154
                %v156 = vld [vmem:[%s128 + $0x68] sm:$0xff]
                %157 = vst [vmem:[%s129 + $0x68] sm:$0xff] %v156
                %v158 = vld [vmem:[%s128 + $0x70] sm:$0xff]
                %159 = vst [vmem:[%s129 + $0x70] sm:$0xff] %v158
                %v160 = vld [vmem:[%s128 + $0x78] sm:$0xff]
                %161 = vst [vmem:[%s129 + $0x78] sm:$0xff] %v160
                %v162 = vld [vmem:[%s128 + $0x80] sm:$0xff]
                %163 = vst [vmem:[%s129 + $0x80] sm:$0xff] %v162
                %v164 = vld [vmem:[%s128 + $0x88] sm:$0xff]
                %165 = vst [vmem:[%s129 + $0x88] sm:$0xff] %v164
                %v166 = vld [vmem:[%s128 + $0x90] sm:$0xff]
                %167 = vst [vmem:[%s129 + $0x90] sm:$0xff] %v166
                %v168 = vld [vmem:[%s128 + $0x98] sm:$0xff]
                %169 = vst [vmem:[%s129 + $0x98] sm:$0xff] %v168
                %v170 = vld [vmem:[%s128 + $0xa0] sm:$0xff]
                %171 = vst [vmem:[%s129 + $0xa0] sm:$0xff] %v170
                %v172 = vld [vmem:[%s128 + $0xa8] sm:$0xff]
                %173 = vst [vmem:[%s129 + $0xa8] sm:$0xff] %v172
                %v174 = vld [vmem:[%s128 + $0xb0] sm:$0xff]
                %175 = vst [vmem:[%s129 + $0xb0] sm:$0xff] %v174
                %v176 = vld [vmem:[%s128 + $0xb8] sm:$0xff]
                %177 = vst [vmem:[%s129 + $0xb8] sm:$0xff] %v176
                %v178 = vld [vmem:[%s128 + $0x180] sm:$0xff]
                %179 = vst [vmem:[%s129 + $0xc0] sm:$0xff] %v178
                %v180 = vld [vmem:[%s128 + $0x188] sm:$0xff]
                %181 = vst [vmem:[%s129 + $0xc8] sm:$0xff] %v180
                %v182 = vld [vmem:[%s128 + $0x190] sm:$0xff]
                %183 = vst [vmem:[%s129 + $0xd0] sm:$0xff] %v182
                %v184 = vld [vmem:[%s128 + $0x198] sm:$0xff]
                %185 = vst [vmem:[%s129 + $0xd8] sm:$0xff] %v184
                %v186 = vld [vmem:[%s128 + $0x1a0] sm:$0xff]
                %187 = vst [vmem:[%s129 + $0xe0] sm:$0xff] %v186
                %v188 = vld [vmem:[%s128 + $0x1a8] sm:$0xff]
                %189 = vst [vmem:[%s129 + $0xe8] sm:$0xff] %v188
                %v190 = vld [vmem:[%s128 + $0x1b0] sm:$0xff]
                %191 = vst [vmem:[%s129 + $0xf0] sm:$0xff] %v190
                %v192 = vld [vmem:[%s128 + $0x1b8] sm:$0xff]
                %193 = vst [vmem:[%s129 + $0xf8] sm:$0xff] %v192
                %v194 = vld [vmem:[%s128 + $0x1c0] sm:$0xff]
                %195 = vst [vmem:[%s129 + $0x100] sm:$0xff] %v194
                %v196 = vld [vmem:[%s128 + $0x1c8] sm:$0xff]
                %197 = vst [vmem:[%s129 + $0x108] sm:$0xff] %v196
                %v198 = vld [vmem:[%s128 + $0x1d0] sm:$0xff]
                %199 = vst [vmem:[%s129 + $0x110] sm:$0xff] %v198
                %v200 = vld [vmem:[%s128 + $0x1d8] sm:$0xff]
                %201 = vst [vmem:[%s129 + $0x118] sm:$0xff] %v200
                %v202 = vld [vmem:[%s128 + $0x1e0] sm:$0xff]
                %203 = vst [vmem:[%s129 + $0x120] sm:$0xff] %v202
                %v204 = vld [vmem:[%s128 + $0x1e8] sm:$0xff]
                %205 = vst [vmem:[%s129 + $0x128] sm:$0xff] %v204
                %v206 = vld [vmem:[%s128 + $0x1f0] sm:$0xff]
                %207 = vst [vmem:[%s129 + $0x130] sm:$0xff] %v206
                %v208 = vld [vmem:[%s128 + $0x1f8] sm:$0xff]
                %209 = vst [vmem:[%s129 + $0x138] sm:$0xff] %v208
                %v210 = vld [vmem:[%s128 + $0x200] sm:$0xff]
                %211 = vst [vmem:[%s129 + $0x140] sm:$0xff] %v210
                %v212 = vld [vmem:[%s128 + $0x208] sm:$0xff]
                %213 = vst [vmem:[%s129 + $0x148] sm:$0xff] %v212
                %v214 = vld [vmem:[%s128 + $0x210] sm:$0xff]
                %215 = vst [vmem:[%s129 + $0x150] sm:$0xff] %v214
                %v216 = vld [vmem:[%s128 + $0x218] sm:$0xff]
                %217 = vst [vmem:[%s129 + $0x158] sm:$0xff] %v216
                %v218 = vld [vmem:[%s128 + $0x220] sm:$0xff]
                %219 = vst [vmem:[%s129 + $0x160] sm:$0xff] %v218
                %v220 = vld [vmem:[%s128 + $0x228] sm:$0xff]
                %221 = vst [vmem:[%s129 + $0x168] sm:$0xff] %v220
                %v222 = vld [vmem:[%s128 + $0x230] sm:$0xff]
                %223 = vst [vmem:[%s129 + $0x170] sm:$0xff] %v222
                %v224 = vld [vmem:[%s128 + $0x238] sm:$0xff]
                %225 = vst [vmem:[%s129 + $0x178] sm:$0xff] %v224
                %v226 = vld [vmem:[%s128 + $0x300] sm:$0xff]
                %227 = vst [vmem:[%s129 + $0x180] sm:$0xff] %v226
                %v228 = vld [vmem:[%s128 + $0x308] sm:$0xff]
                %229 = vst [vmem:[%s129 + $0x188] sm:$0xff] %v228
                %v230 = vld [vmem:[%s128 + $0x310] sm:$0xff]
                %231 = vst [vmem:[%s129 + $0x190] sm:$0xff] %v230
                %v232 = vld [vmem:[%s128 + $0x318] sm:$0xff]
                %233 = vst [vmem:[%s129 + $0x198] sm:$0xff] %v232
                %v234 = vld [vmem:[%s128 + $0x320] sm:$0xff]
                %235 = vst [vmem:[%s129 + $0x1a0] sm:$0xff] %v234
                %v236 = vld [vmem:[%s128 + $0x328] sm:$0xff]
                %237 = vst [vmem:[%s129 + $0x1a8] sm:$0xff] %v236
                %v238 = vld [vmem:[%s128 + $0x330] sm:$0xff]
                %239 = vst [vmem:[%s129 + $0x1b0] sm:$0xff] %v238
                %v240 = vld [vmem:[%s128 + $0x338] sm:$0xff]
                %241 = vst [vmem:[%s129 + $0x1b8] sm:$0xff] %v240
                %v242 = vld [vmem:[%s128 + $0x340] sm:$0xff]
                %243 = vst [vmem:[%s129 + $0x1c0] sm:$0xff] %v242
                %v244 = vld [vmem:[%s128 + $0x348] sm:$0xff]
                %245 = vst [vmem:[%s129 + $0x1c8] sm:$0xff] %v244
                %v246 = vld [vmem:[%s128 + $0x350] sm:$0xff]
                %247 = vst [vmem:[%s129 + $0x1d0] sm:$0xff] %v246
                %v248 = vld [vmem:[%s128 + $0x358] sm:$0xff]
                %249 = vst [vmem:[%s129 + $0x1d8] sm:$0xff] %v248
                %v250 = vld [vmem:[%s128 + $0x360] sm:$0xff]
                %251 = vst [vmem:[%s129 + $0x1e0] sm:$0xff] %v250
                %v252 = vld [vmem:[%s128 + $0x368] sm:$0xff]
                %253 = vst [vmem:[%s129 + $0x1e8] sm:$0xff] %v252
                %v254 = vld [vmem:[%s128 + $0x370] sm:$0xff]
                %255 = vst [vmem:[%s129 + $0x1f0] sm:$0xff] %v254
                %v256 = vld [vmem:[%s128 + $0x378] sm:$0xff]
                %257 = vst [vmem:[%s129 + $0x1f8] sm:$0xff] %v256
                %v258 = vld [vmem:[%s128 + $0x380] sm:$0xff]
                %259 = vst [vmem:[%s129 + $0x200] sm:$0xff] %v258
                %v260 = vld [vmem:[%s128 + $0x388] sm:$0xff]
                %261 = vst [vmem:[%s129 + $0x208] sm:$0xff] %v260
                %v262 = vld [vmem:[%s128 + $0x390] sm:$0xff]
                %263 = vst [vmem:[%s129 + $0x210] sm:$0xff] %v262
                %v264 = vld [vmem:[%s128 + $0x398] sm:$0xff]
                %265 = vst [vmem:[%s129 + $0x218] sm:$0xff] %v264
                %v266 = vld [vmem:[%s128 + $0x3a0] sm:$0xff]
                %267 = vst [vmem:[%s129 + $0x220] sm:$0xff] %v266
                %v268 = vld [vmem:[%s128 + $0x3a8] sm:$0xff]
                %269 = vst [vmem:[%s129 + $0x228] sm:$0xff] %v268
                %v270 = vld [vmem:[%s128 + $0x3b0] sm:$0xff]
                %271 = vst [vmem:[%s129 + $0x230] sm:$0xff] %v270
                %v272 = vld [vmem:[%s128 + $0x3b8] sm:$0xff]
                %273 = vst [vmem:[%s129 + $0x238] sm:$0xff] %v272
                %v274 = vld [vmem:[%s128 + $0x480] sm:$0xff]
                %275 = vst [vmem:[%s129 + $0x240] sm:$0xff] %v274
                %v276 = vld [vmem:[%s128 + $0x488] sm:$0xff]
                %277 = vst [vmem:[%s129 + $0x248] sm:$0xff] %v276
                %v278 = vld [vmem:[%s128 + $0x490] sm:$0xff]
                %279 = vst [vmem:[%s129 + $0x250] sm:$0xff] %v278
                %v280 = vld [vmem:[%s128 + $0x498] sm:$0xff]
                %281 = vst [vmem:[%s129 + $0x258] sm:$0xff] %v280
                %v282 = vld [vmem:[%s128 + $0x4a0] sm:$0xff]
                %283 = vst [vmem:[%s129 + $0x260] sm:$0xff] %v282
                %v284 = vld [vmem:[%s128 + $0x4a8] sm:$0xff]
                %285 = vst [vmem:[%s129 + $0x268] sm:$0xff] %v284
                %v286 = vld [vmem:[%s128 + $0x4b0] sm:$0xff]
                %287 = vst [vmem:[%s129 + $0x270] sm:$0xff] %v286
                %v288 = vld [vmem:[%s128 + $0x4b8] sm:$0xff]
                %289 = vst [vmem:[%s129 + $0x278] sm:$0xff] %v288
                %v290 = vld [vmem:[%s128 + $0x4c0] sm:$0xff]
                %291 = vst [vmem:[%s129 + $0x280] sm:$0xff] %v290
                %v292 = vld [vmem:[%s128 + $0x4c8] sm:$0xff]
                %293 = vst [vmem:[%s129 + $0x288] sm:$0xff] %v292
                %v294 = vld [vmem:[%s128 + $0x4d0] sm:$0xff]
                %295 = vst [vmem:[%s129 + $0x290] sm:$0xff] %v294
                %v296 = vld [vmem:[%s128 + $0x4d8] sm:$0xff]
                %297 = vst [vmem:[%s129 + $0x298] sm:$0xff] %v296
                %v298 = vld [vmem:[%s128 + $0x4e0] sm:$0xff]
                %299 = vst [vmem:[%s129 + $0x2a0] sm:$0xff] %v298
                %v300 = vld [vmem:[%s128 + $0x4e8] sm:$0xff]
                %301 = vst [vmem:[%s129 + $0x2a8] sm:$0xff] %v300
                %v302 = vld [vmem:[%s128 + $0x4f0] sm:$0xff]
                %303 = vst [vmem:[%s129 + $0x2b0] sm:$0xff] %v302
                %v304 = vld [vmem:[%s128 + $0x4f8] sm:$0xff]
                %305 = vst [vmem:[%s129 + $0x2b8] sm:$0xff] %v304
                %v306 = vld [vmem:[%s128 + $0x500] sm:$0xff]
                %307 = vst [vmem:[%s129 + $0x2c0] sm:$0xff] %v306
                %v308 = vld [vmem:[%s128 + $0x508] sm:$0xff]
                %309 = vst [vmem:[%s129 + $0x2c8] sm:$0xff] %v308
                %v310 = vld [vmem:[%s128 + $0x510] sm:$0xff]
                %311 = vst [vmem:[%s129 + $0x2d0] sm:$0xff] %v310
                %v312 = vld [vmem:[%s128 + $0x518] sm:$0xff]
                %313 = vst [vmem:[%s129 + $0x2d8] sm:$0xff] %v312
                %v314 = vld [vmem:[%s128 + $0x520] sm:$0xff]
                %315 = vst [vmem:[%s129 + $0x2e0] sm:$0xff] %v314
                %v316 = vld [vmem:[%s128 + $0x528] sm:$0xff]
                %317 = vst [vmem:[%s129 + $0x2e8] sm:$0xff] %v316
                %v318 = vld [vmem:[%s128 + $0x530] sm:$0xff]
                %319 = vst [vmem:[%s129 + $0x2f0] sm:$0xff] %v318
                %v320 = vld [vmem:[%s128 + $0x538] sm:$0xff]
                %321 = vst [vmem:[%s129 + $0x2f8] sm:$0xff] %v320
              $region33: #{tpu_custom_call.1} parent=27 // loop_footer
                %s127 = sadd.s32 1, %s123
              $region34: #{tpu_custom_call.1} parent=27 // loop_footer_branch
                %122 = sbr.rel target = $region30
              $region35: #{tpu_custom_call.1} parent=27 // loop_exit
                _
            $region28: #{tpu_custom_call.1} parent=23 // pred_fallthru
              _
            // Predicated region
            $region36: #{tpu_custom_call.1} parent=23 // pred_check
              _
            $region37: #{tpu_custom_call.1} parent=23 // pred_check_branch
              %323 = sbr.rel target = $region39
            $region38: #{tpu_custom_call.1} parent=23 // pred_region
              _
            $region39: #{tpu_custom_call.1} parent=23 // pred_fallthru
              _
          $region24: #{tpu_custom_call.1} parent=19 // pred_fallthru
            _
          %324 = vnop
        $region20: #{tpu_custom_call.1} parent=15 // pred_fallthru
          _
        // Predicated region
        $region40: #{tpu_custom_call.1} parent=15 // pred_check
          %p325 = pneg %p57
        $region41: #{tpu_custom_call.1} parent=15 // pred_check_branch
          %327 = sbr.rel (%p325) target = $region43
        $region42: #{tpu_custom_call.1} parent=15 // pred_region
          %s328 = sand.u32 %s47, 1
          %s329 = sand.u32 %s47, 1
          %s330 = smul.addr %s329, 768
          %s331 = scalar_lea.vmem [#allocation3], %s330
          %s332 = smul.u32 24, %s11
          %s333 = smul.addr %s332, 8
          %s334 = scalar_lea.vmem %s1, %s333
          // Predicated region
          $region44: #{tpu_custom_call.1} parent=42 // pred_check
            _
          $region45: #{tpu_custom_call.1} parent=42 // pred_check_branch
            %336 = sbr.rel (0) target = $region47
          $region46: #{tpu_custom_call.1} parent=42 // pred_region
            // Predicated region
            $region48: #{tpu_custom_call.1} parent=46 // pred_check
              _
            $region49: #{tpu_custom_call.1} parent=46 // pred_check_branch
              %338 = sbr.rel (0) target = $region51
            $region50: #{tpu_custom_call.1} parent=46 // pred_region
              loop: start=0, step=1, limit=1
              $region52: #{tpu_custom_call.1} parent=50 // loop_pre_header
                _
              $region53: #{tpu_custom_call.1} parent=50 // loop_header
                %s340 = sphi 0, %s344
                %p341 = scmp.ge.s32.totalorder %s340, 1
                %s345 = sphi %s334, %s334
                %s346 = sphi %s331, %s331
              $region54: #{tpu_custom_call.1} parent=50 // loop_header_branch
                %343 = sbr.rel (%p341) target = $region58
              $region55: #{tpu_custom_call.1} parent=50 // loop_body
                %v347 = vld [vmem:[%s345] sm:$0xff]
                %348 = vst [vmem:[%s346] sm:$0xff] %v347
                %v349 = vld [vmem:[%s345 + $0x8] sm:$0xff]
                %350 = vst [vmem:[%s346 + $0x8] sm:$0xff] %v349
                %v351 = vld [vmem:[%s345 + $0x10] sm:$0xff]
                %352 = vst [vmem:[%s346 + $0x10] sm:$0xff] %v351
                %v353 = vld [vmem:[%s345 + $0x18] sm:$0xff]
                %354 = vst [vmem:[%s346 + $0x18] sm:$0xff] %v353
                %v355 = vld [vmem:[%s345 + $0x20] sm:$0xff]
                %356 = vst [vmem:[%s346 + $0x20] sm:$0xff] %v355
                %v357 = vld [vmem:[%s345 + $0x28] sm:$0xff]
                %358 = vst [vmem:[%s346 + $0x28] sm:$0xff] %v357
                %v359 = vld [vmem:[%s345 + $0x30] sm:$0xff]
                %360 = vst [vmem:[%s346 + $0x30] sm:$0xff] %v359
                %v361 = vld [vmem:[%s345 + $0x38] sm:$0xff]
                %362 = vst [vmem:[%s346 + $0x38] sm:$0xff] %v361
                %v363 = vld [vmem:[%s345 + $0x40] sm:$0xff]
                %364 = vst [vmem:[%s346 + $0x40] sm:$0xff] %v363
                %v365 = vld [vmem:[%s345 + $0x48] sm:$0xff]
                %366 = vst [vmem:[%s346 + $0x48] sm:$0xff] %v365
                %v367 = vld [vmem:[%s345 + $0x50] sm:$0xff]
                %368 = vst [vmem:[%s346 + $0x50] sm:$0xff] %v367
                %v369 = vld [vmem:[%s345 + $0x58] sm:$0xff]
                %370 = vst [vmem:[%s346 + $0x58] sm:$0xff] %v369
                %v371 = vld [vmem:[%s345 + $0x60] sm:$0xff]
                %372 = vst [vmem:[%s346 + $0x60] sm:$0xff] %v371
                %v373 = vld [vmem:[%s345 + $0x68] sm:$0xff]
                %374 = vst [vmem:[%s346 + $0x68] sm:$0xff] %v373
                %v375 = vld [vmem:[%s345 + $0x70] sm:$0xff]
                %376 = vst [vmem:[%s346 + $0x70] sm:$0xff] %v375
                %v377 = vld [vmem:[%s345 + $0x78] sm:$0xff]
                %378 = vst [vmem:[%s346 + $0x78] sm:$0xff] %v377
                %v379 = vld [vmem:[%s345 + $0x80] sm:$0xff]
                %380 = vst [vmem:[%s346 + $0x80] sm:$0xff] %v379
                %v381 = vld [vmem:[%s345 + $0x88] sm:$0xff]
                %382 = vst [vmem:[%s346 + $0x88] sm:$0xff] %v381
                %v383 = vld [vmem:[%s345 + $0x90] sm:$0xff]
                %384 = vst [vmem:[%s346 + $0x90] sm:$0xff] %v383
                %v385 = vld [vmem:[%s345 + $0x98] sm:$0xff]
                %386 = vst [vmem:[%s346 + $0x98] sm:$0xff] %v385
                %v387 = vld [vmem:[%s345 + $0xa0] sm:$0xff]
                %388 = vst [vmem:[%s346 + $0xa0] sm:$0xff] %v387
                %v389 = vld [vmem:[%s345 + $0xa8] sm:$0xff]
                %390 = vst [vmem:[%s346 + $0xa8] sm:$0xff] %v389
                %v391 = vld [vmem:[%s345 + $0xb0] sm:$0xff]
                %392 = vst [vmem:[%s346 + $0xb0] sm:$0xff] %v391
                %v393 = vld [vmem:[%s345 + $0xb8] sm:$0xff]
                %394 = vst [vmem:[%s346 + $0xb8] sm:$0xff] %v393
                %v395 = vld [vmem:[%s345 + $0x180] sm:$0xff]
                %396 = vst [vmem:[%s346 + $0xc0] sm:$0xff] %v395
                %v397 = vld [vmem:[%s345 + $0x188] sm:$0xff]
                %398 = vst [vmem:[%s346 + $0xc8] sm:$0xff] %v397
                %v399 = vld [vmem:[%s345 + $0x190] sm:$0xff]
                %400 = vst [vmem:[%s346 + $0xd0] sm:$0xff] %v399
                %v401 = vld [vmem:[%s345 + $0x198] sm:$0xff]
                %402 = vst [vmem:[%s346 + $0xd8] sm:$0xff] %v401
                %v403 = vld [vmem:[%s345 + $0x1a0] sm:$0xff]
                %404 = vst [vmem:[%s346 + $0xe0] sm:$0xff] %v403
                %v405 = vld [vmem:[%s345 + $0x1a8] sm:$0xff]
                %406 = vst [vmem:[%s346 + $0xe8] sm:$0xff] %v405
                %v407 = vld [vmem:[%s345 + $0x1b0] sm:$0xff]
                %408 = vst [vmem:[%s346 + $0xf0] sm:$0xff] %v407
                %v409 = vld [vmem:[%s345 + $0x1b8] sm:$0xff]
                %410 = vst [vmem:[%s346 + $0xf8] sm:$0xff] %v409
                %v411 = vld [vmem:[%s345 + $0x1c0] sm:$0xff]
                %412 = vst [vmem:[%s346 + $0x100] sm:$0xff] %v411
                %v413 = vld [vmem:[%s345 + $0x1c8] sm:$0xff]
                %414 = vst [vmem:[%s346 + $0x108] sm:$0xff] %v413
                %v415 = vld [vmem:[%s345 + $0x1d0] sm:$0xff]
                %416 = vst [vmem:[%s346 + $0x110] sm:$0xff] %v415
                %v417 = vld [vmem:[%s345 + $0x1d8] sm:$0xff]
                %418 = vst [vmem:[%s346 + $0x118] sm:$0xff] %v417
                %v419 = vld [vmem:[%s345 + $0x1e0] sm:$0xff]
                %420 = vst [vmem:[%s346 + $0x120] sm:$0xff] %v419
                %v421 = vld [vmem:[%s345 + $0x1e8] sm:$0xff]
                %422 = vst [vmem:[%s346 + $0x128] sm:$0xff] %v421
                %v423 = vld [vmem:[%s345 + $0x1f0] sm:$0xff]
                %424 = vst [vmem:[%s346 + $0x130] sm:$0xff] %v423
                %v425 = vld [vmem:[%s345 + $0x1f8] sm:$0xff]
                %426 = vst [vmem:[%s346 + $0x138] sm:$0xff] %v425
                %v427 = vld [vmem:[%s345 + $0x200] sm:$0xff]
                %428 = vst [vmem:[%s346 + $0x140] sm:$0xff] %v427
                %v429 = vld [vmem:[%s345 + $0x208] sm:$0xff]
                %430 = vst [vmem:[%s346 + $0x148] sm:$0xff] %v429
                %v431 = vld [vmem:[%s345 + $0x210] sm:$0xff]
                %432 = vst [vmem:[%s346 + $0x150] sm:$0xff] %v431
                %v433 = vld [vmem:[%s345 + $0x218] sm:$0xff]
                %434 = vst [vmem:[%s346 + $0x158] sm:$0xff] %v433
                %v435 = vld [vmem:[%s345 + $0x220] sm:$0xff]
                %436 = vst [vmem:[%s346 + $0x160] sm:$0xff] %v435
                %v437 = vld [vmem:[%s345 + $0x228] sm:$0xff]
                %438 = vst [vmem:[%s346 + $0x168] sm:$0xff] %v437
                %v439 = vld [vmem:[%s345 + $0x230] sm:$0xff]
                %440 = vst [vmem:[%s346 + $0x170] sm:$0xff] %v439
                %v441 = vld [vmem:[%s345 + $0x238] sm:$0xff]
                %442 = vst [vmem:[%s346 + $0x178] sm:$0xff] %v441
                %v443 = vld [vmem:[%s345 + $0x300] sm:$0xff]
                %444 = vst [vmem:[%s346 + $0x180] sm:$0xff] %v443
                %v445 = vld [vmem:[%s345 + $0x308] sm:$0xff]
                %446 = vst [vmem:[%s346 + $0x188] sm:$0xff] %v445
                %v447 = vld [vmem:[%s345 + $0x310] sm:$0xff]
                %448 = vst [vmem:[%s346 + $0x190] sm:$0xff] %v447
                %v449 = vld [vmem:[%s345 + $0x318] sm:$0xff]
                %450 = vst [vmem:[%s346 + $0x198] sm:$0xff] %v449
                %v451 = vld [vmem:[%s345 + $0x320] sm:$0xff]
                %452 = vst [vmem:[%s346 + $0x1a0] sm:$0xff] %v451
                %v453 = vld [vmem:[%s345 + $0x328] sm:$0xff]
                %454 = vst [vmem:[%s346 + $0x1a8] sm:$0xff] %v453
                %v455 = vld [vmem:[%s345 + $0x330] sm:$0xff]
                %456 = vst [vmem:[%s346 + $0x1b0] sm:$0xff] %v455
                %v457 = vld [vmem:[%s345 + $0x338] sm:$0xff]
                %458 = vst [vmem:[%s346 + $0x1b8] sm:$0xff] %v457
                %v459 = vld [vmem:[%s345 + $0x340] sm:$0xff]
                %460 = vst [vmem:[%s346 + $0x1c0] sm:$0xff] %v459
                %v461 = vld [vmem:[%s345 + $0x348] sm:$0xff]
                %462 = vst [vmem:[%s346 + $0x1c8] sm:$0xff] %v461
                %v463 = vld [vmem:[%s345 + $0x350] sm:$0xff]
                %464 = vst [vmem:[%s346 + $0x1d0] sm:$0xff] %v463
                %v465 = vld [vmem:[%s345 + $0x358] sm:$0xff]
                %466 = vst [vmem:[%s346 + $0x1d8] sm:$0xff] %v465
                %v467 = vld [vmem:[%s345 + $0x360] sm:$0xff]
                %468 = vst [vmem:[%s346 + $0x1e0] sm:$0xff] %v467
                %v469 = vld [vmem:[%s345 + $0x368] sm:$0xff]
                %470 = vst [vmem:[%s346 + $0x1e8] sm:$0xff] %v469
                %v471 = vld [vmem:[%s345 + $0x370] sm:$0xff]
                %472 = vst [vmem:[%s346 + $0x1f0] sm:$0xff] %v471
                %v473 = vld [vmem:[%s345 + $0x378] sm:$0xff]
                %474 = vst [vmem:[%s346 + $0x1f8] sm:$0xff] %v473
                %v475 = vld [vmem:[%s345 + $0x380] sm:$0xff]
                %476 = vst [vmem:[%s346 + $0x200] sm:$0xff] %v475
                %v477 = vld [vmem:[%s345 + $0x388] sm:$0xff]
                %478 = vst [vmem:[%s346 + $0x208] sm:$0xff] %v477
                %v479 = vld [vmem:[%s345 + $0x390] sm:$0xff]
                %480 = vst [vmem:[%s346 + $0x210] sm:$0xff] %v479
                %v481 = vld [vmem:[%s345 + $0x398] sm:$0xff]
                %482 = vst [vmem:[%s346 + $0x218] sm:$0xff] %v481
                %v483 = vld [vmem:[%s345 + $0x3a0] sm:$0xff]
                %484 = vst [vmem:[%s346 + $0x220] sm:$0xff] %v483
                %v485 = vld [vmem:[%s345 + $0x3a8] sm:$0xff]
                %486 = vst [vmem:[%s346 + $0x228] sm:$0xff] %v485
                %v487 = vld [vmem:[%s345 + $0x3b0] sm:$0xff]
                %488 = vst [vmem:[%s346 + $0x230] sm:$0xff] %v487
                %v489 = vld [vmem:[%s345 + $0x3b8] sm:$0xff]
                %490 = vst [vmem:[%s346 + $0x238] sm:$0xff] %v489
                %v491 = vld [vmem:[%s345 + $0x480] sm:$0xff]
                %492 = vst [vmem:[%s346 + $0x240] sm:$0xff] %v491
                %v493 = vld [vmem:[%s345 + $0x488] sm:$0xff]
                %494 = vst [vmem:[%s346 + $0x248] sm:$0xff] %v493
                %v495 = vld [vmem:[%s345 + $0x490] sm:$0xff]
                %496 = vst [vmem:[%s346 + $0x250] sm:$0xff] %v495
                %v497 = vld [vmem:[%s345 + $0x498] sm:$0xff]
                %498 = vst [vmem:[%s346 + $0x258] sm:$0xff] %v497
                %v499 = vld [vmem:[%s345 + $0x4a0] sm:$0xff]
                %500 = vst [vmem:[%s346 + $0x260] sm:$0xff] %v499
                %v501 = vld [vmem:[%s345 + $0x4a8] sm:$0xff]
                %502 = vst [vmem:[%s346 + $0x268] sm:$0xff] %v501
                %v503 = vld [vmem:[%s345 + $0x4b0] sm:$0xff]
                %504 = vst [vmem:[%s346 + $0x270] sm:$0xff] %v503
                %v505 = vld [vmem:[%s345 + $0x4b8] sm:$0xff]
                %506 = vst [vmem:[%s346 + $0x278] sm:$0xff] %v505
                %v507 = vld [vmem:[%s345 + $0x4c0] sm:$0xff]
                %508 = vst [vmem:[%s346 + $0x280] sm:$0xff] %v507
                %v509 = vld [vmem:[%s345 + $0x4c8] sm:$0xff]
                %510 = vst [vmem:[%s346 + $0x288] sm:$0xff] %v509
                %v511 = vld [vmem:[%s345 + $0x4d0] sm:$0xff]
                %512 = vst [vmem:[%s346 + $0x290] sm:$0xff] %v511
                %v513 = vld [vmem:[%s345 + $0x4d8] sm:$0xff]
                %514 = vst [vmem:[%s346 + $0x298] sm:$0xff] %v513
                %v515 = vld [vmem:[%s345 + $0x4e0] sm:$0xff]
                %516 = vst [vmem:[%s346 + $0x2a0] sm:$0xff] %v515
                %v517 = vld [vmem:[%s345 + $0x4e8] sm:$0xff]
                %518 = vst [vmem:[%s346 + $0x2a8] sm:$0xff] %v517
                %v519 = vld [vmem:[%s345 + $0x4f0] sm:$0xff]
                %520 = vst [vmem:[%s346 + $0x2b0] sm:$0xff] %v519
                %v521 = vld [vmem:[%s345 + $0x4f8] sm:$0xff]
                %522 = vst [vmem:[%s346 + $0x2b8] sm:$0xff] %v521
                %v523 = vld [vmem:[%s345 + $0x500] sm:$0xff]
                %524 = vst [vmem:[%s346 + $0x2c0] sm:$0xff] %v523
                %v525 = vld [vmem:[%s345 + $0x508] sm:$0xff]
                %526 = vst [vmem:[%s346 + $0x2c8] sm:$0xff] %v525
                %v527 = vld [vmem:[%s345 + $0x510] sm:$0xff]
                %528 = vst [vmem:[%s346 + $0x2d0] sm:$0xff] %v527
                %v529 = vld [vmem:[%s345 + $0x518] sm:$0xff]
                %530 = vst [vmem:[%s346 + $0x2d8] sm:$0xff] %v529
                %v531 = vld [vmem:[%s345 + $0x520] sm:$0xff]
                %532 = vst [vmem:[%s346 + $0x2e0] sm:$0xff] %v531
                %v533 = vld [vmem:[%s345 + $0x528] sm:$0xff]
                %534 = vst [vmem:[%s346 + $0x2e8] sm:$0xff] %v533
                %v535 = vld [vmem:[%s345 + $0x530] sm:$0xff]
                %536 = vst [vmem:[%s346 + $0x2f0] sm:$0xff] %v535
                %v537 = vld [vmem:[%s345 + $0x538] sm:$0xff]
                %538 = vst [vmem:[%s346 + $0x2f8] sm:$0xff] %v537
              $region56: #{tpu_custom_call.1} parent=50 // loop_footer
                %s344 = sadd.s32 1, %s340
              $region57: #{tpu_custom_call.1} parent=50 // loop_footer_branch
                %339 = sbr.rel target = $region53
              $region58: #{tpu_custom_call.1} parent=50 // loop_exit
                _
            $region51: #{tpu_custom_call.1} parent=46 // pred_fallthru
              _
            // Predicated region
            $region59: #{tpu_custom_call.1} parent=46 // pred_check
              _
            $region60: #{tpu_custom_call.1} parent=46 // pred_check_branch
              %540 = sbr.rel target = $region62
            $region61: #{tpu_custom_call.1} parent=46 // pred_region
              _
            $region62: #{tpu_custom_call.1} parent=46 // pred_fallthru
              _
          $region47: #{tpu_custom_call.1} parent=42 // pred_fallthru
            _
          %541 = vnop
        $region43: #{tpu_custom_call.1} parent=15 // pred_fallthru
          _
      $region16: #{tpu_custom_call.1} parent=5 // pred_fallthru
        _
      %p542 = scmp.le.s32.totalorder 1, %s11
      %p543 = scmp.lt.s32.totalorder %s11, 3
      %p544 = pnand %p542, %p543
      %p545 = pneg %p544
      // Predicated region
      $region63: #{tpu_custom_call.1} parent=5 // pred_check
        _
      $region64: #{tpu_custom_call.1} parent=5 // pred_check_branch
        %547 = sbr.rel (%p544) target = $region66
      $region65: #{tpu_custom_call.1} parent=5 // pred_region
        %s548 = ssub.s32 %s11, 1
        %s549 = sand.u32 %s24, 1
        %s550 = sand.u32 %s24, 1
        %s551 = smul.addr %s550, 768
        %s552 = scalar_lea.vmem [#allocation2], %s551
        // Predicated region
        $region67: #{tpu_custom_call.1} parent=65 // pred_check
          %p553 = pneg %p37
        $region68: #{tpu_custom_call.1} parent=65 // pred_check_branch
          %555 = sbr.rel (%p553) target = $region70
        $region69: #{tpu_custom_call.1} parent=65 // pred_region
          _
        $region70: #{tpu_custom_call.1} parent=65 // pred_fallthru
          _
        %s556 = sand.u32 %s50, 1
        %s557 = sand.u32 %s50, 1
        %s558 = smul.addr %s557, 768
        %s559 = scalar_lea.vmem [#allocation3], %s558
        // Predicated region
        $region71: #{tpu_custom_call.1} parent=65 // pred_check
          %p560 = pneg %p63
        $region72: #{tpu_custom_call.1} parent=65 // pred_check_branch
          %562 = sbr.rel (%p560) target = $region74
        $region73: #{tpu_custom_call.1} parent=65 // pred_region
          _
        $region74: #{tpu_custom_call.1} parent=65 // pred_fallthru
          _
        %s563 = sand.u32 %s24, 1
        %s564 = sand.u32 %s24, 1
        %s565 = smul.addr %s564, 768
        %s566 = scalar_lea.vmem [#allocation2], %s565
        %p567 = pneg %p37
        %p568 = pneg %p34
        %s569 = sand.u32 %s50, 1
        %s570 = sand.u32 %s50, 1
        %s571 = smul.addr %s570, 768
        %s572 = scalar_lea.vmem [#allocation3], %s571
        %p573 = pneg %p63
        %p574 = pneg %p60
        %p575 = pneg %p89
        %p576 = pneg %p86
        %s577 = sand.u32 %s76, 1
        %s578 = scalar_lea.sflag [#allocation5], %s577
        %s579 = sand.u32 %s76, 1
        %s580 = smul.addr %s579, 48
        %s581 = scalar_lea.vmem [#allocation4], %s580
        %s582 = smul.u32 24, %s16
        %s583 = smul.u32 24, %s16
        %s584 = smul.u32 24, %s16
        %v585 = vld [vmem:[%s552] sm:$0xff]
        %v586 = vld [vmem:[%s552 + $0x8] sm:$0xff]
        %v587 = vld [vmem:[%s552 + $0x10] sm:$0xff]
        %v588 = vld [vmem:[%s552 + $0x18] sm:$0xff]
        %v589 = vld [vmem:[%s552 + $0x20] sm:$0xff]
        %v590 = vld [vmem:[%s552 + $0x28] sm:$0xff]
        %v591 = vld [vmem:[%s552 + $0x30] sm:$0xff]
        %v592 = vld [vmem:[%s552 + $0x38] sm:$0xff]
        %v593 = vld [vmem:[%s552 + $0x40] sm:$0xff]
        %v594 = vld [vmem:[%s552 + $0x48] sm:$0xff]
        %v595 = vld [vmem:[%s552 + $0x50] sm:$0xff]
        %v596 = vld [vmem:[%s552 + $0x58] sm:$0xff]
        %v597 = vld [vmem:[%s552 + $0x60] sm:$0xff]
        %v598 = vld [vmem:[%s552 + $0x68] sm:$0xff]
        %v599 = vld [vmem:[%s552 + $0x70] sm:$0xff]
        %v600 = vld [vmem:[%s552 + $0x78] sm:$0xff]
        %v601 = vld [vmem:[%s552 + $0x80] sm:$0xff]
        %v602 = vld [vmem:[%s552 + $0x88] sm:$0xff]
        %v603 = vld [vmem:[%s552 + $0x90] sm:$0xff]
        %v604 = vld [vmem:[%s552 + $0x98] sm:$0xff]
        %v605 = vld [vmem:[%s552 + $0xa0] sm:$0xff]
        %v606 = vld [vmem:[%s552 + $0xa8] sm:$0xff]
        %v607 = vld [vmem:[%s552 + $0xb0] sm:$0xff]
        %v608 = vld [vmem:[%s552 + $0xb8] sm:$0xff]
        %v609 = vld [vmem:[%s552 + $0x180] sm:$0xff]
        %v610 = vld [vmem:[%s552 + $0x188] sm:$0xff]
        %v611 = vld [vmem:[%s552 + $0x190] sm:$0xff]
        %v612 = vld [vmem:[%s552 + $0x198] sm:$0xff]
        %v613 = vld [vmem:[%s552 + $0x1a0] sm:$0xff]
        %v614 = vld [vmem:[%s552 + $0x1a8] sm:$0xff]
        %v615 = vld [vmem:[%s552 + $0x1b0] sm:$0xff]
        %v616 = vld [vmem:[%s552 + $0x1b8] sm:$0xff]
        %v617 = vld [vmem:[%s552 + $0x1c0] sm:$0xff]
        %v618 = vld [vmem:[%s552 + $0x1c8] sm:$0xff]
        %v619 = vld [vmem:[%s552 + $0x1d0] sm:$0xff]
        %v620 = vld [vmem:[%s552 + $0x1d8] sm:$0xff]
        %v621 = vld [vmem:[%s552 + $0x1e0] sm:$0xff]
        %v622 = vld [vmem:[%s552 + $0x1e8] sm:$0xff]
        %v623 = vld [vmem:[%s552 + $0x1f0] sm:$0xff]
        %v624 = vld [vmem:[%s552 + $0x1f8] sm:$0xff]
        %v625 = vld [vmem:[%s552 + $0x200] sm:$0xff]
        %v626 = vld [vmem:[%s552 + $0x208] sm:$0xff]
        %v627 = vld [vmem:[%s552 + $0x210] sm:$0xff]
        %v628 = vld [vmem:[%s552 + $0x218] sm:$0xff]
        %v629 = vld [vmem:[%s552 + $0x220] sm:$0xff]
        %v630 = vld [vmem:[%s552 + $0x228] sm:$0xff]
        %v631 = vld [vmem:[%s552 + $0x230] sm:$0xff]
        %v632 = vld [vmem:[%s552 + $0x238] sm:$0xff]
        %v633 = vld [vmem:[%s559] sm:$0xff]
        %v634 = vld [vmem:[%s559 + $0x8] sm:$0xff]
        %v635 = vld [vmem:[%s559 + $0x10] sm:$0xff]
        %v636 = vld [vmem:[%s559 + $0x18] sm:$0xff]
        %v637 = vld [vmem:[%s559 + $0x20] sm:$0xff]
        %v638 = vld [vmem:[%s559 + $0x28] sm:$0xff]
        %v639 = vld [vmem:[%s559 + $0x30] sm:$0xff]
        %v640 = vld [vmem:[%s559 + $0x38] sm:$0xff]
        %v641 = vld [vmem:[%s559 + $0x40] sm:$0xff]
        %v642 = vld [vmem:[%s559 + $0x48] sm:$0xff]
        %v643 = vld [vmem:[%s559 + $0x50] sm:$0xff]
        %v644 = vld [vmem:[%s559 + $0x58] sm:$0xff]
        %v645 = vld [vmem:[%s559 + $0x60] sm:$0xff]
        %v646 = vld [vmem:[%s559 + $0x68] sm:$0xff]
        %v647 = vld [vmem:[%s559 + $0x70] sm:$0xff]
        %v648 = vld [vmem:[%s559 + $0x78] sm:$0xff]
        %v649 = vld [vmem:[%s559 + $0x80] sm:$0xff]
        %v650 = vld [vmem:[%s559 + $0x88] sm:$0xff]
        %v651 = vld [vmem:[%s559 + $0x90] sm:$0xff]
        %v652 = vld [vmem:[%s559 + $0x98] sm:$0xff]
        %v653 = vld [vmem:[%s559 + $0xa0] sm:$0xff]
        %v654 = vld [vmem:[%s559 + $0xa8] sm:$0xff]
        %v655 = vld [vmem:[%s559 + $0xb0] sm:$0xff]
        %v656 = vld [vmem:[%s559 + $0xb8] sm:$0xff]
        %v657 = vld [vmem:[%s559 + $0x180] sm:$0xff]
        %v658 = vld [vmem:[%s559 + $0x188] sm:$0xff]
        %v659 = vld [vmem:[%s559 + $0x190] sm:$0xff]
        %v660 = vld [vmem:[%s559 + $0x198] sm:$0xff]
        %v661 = vld [vmem:[%s559 + $0x1a0] sm:$0xff]
        %v662 = vld [vmem:[%s559 + $0x1a8] sm:$0xff]
        %v663 = vld [vmem:[%s559 + $0x1b0] sm:$0xff]
        %v664 = vld [vmem:[%s559 + $0x1b8] sm:$0xff]
        %v665 = vld [vmem:[%s559 + $0x1c0] sm:$0xff]
        %v666 = vld [vmem:[%s559 + $0x1c8] sm:$0xff]
        %v667 = vld [vmem:[%s559 + $0x1d0] sm:$0xff]
        %v668 = vld [vmem:[%s559 + $0x1d8] sm:$0xff]
        %v669 = vld [vmem:[%s559 + $0x1e0] sm:$0xff]
        %v670 = vld [vmem:[%s559 + $0x1e8] sm:$0xff]
        %v671 = vld [vmem:[%s559 + $0x1f0] sm:$0xff]
        %v672 = vld [vmem:[%s559 + $0x1f8] sm:$0xff]
        %v673 = vld [vmem:[%s559 + $0x200] sm:$0xff]
        %v674 = vld [vmem:[%s559 + $0x208] sm:$0xff]
        %v675 = vld [vmem:[%s559 + $0x210] sm:$0xff]
        %v676 = vld [vmem:[%s559 + $0x218] sm:$0xff]
        %v677 = vld [vmem:[%s559 + $0x220] sm:$0xff]
        %v678 = vld [vmem:[%s559 + $0x228] sm:$0xff]
        %v679 = vld [vmem:[%s559 + $0x230] sm:$0xff]
        %v680 = vld [vmem:[%s559 + $0x238] sm:$0xff]
        %v681 = vsub.f32 %v585, %v633
        %v682 = vsub.f32 %v586, %v634
        %v683 = vsub.f32 %v587, %v635
        %v684 = vsub.f32 %v588, %v636
        %v685 = vsub.f32 %v589, %v637
        %v686 = vsub.f32 %v590, %v638
        %v687 = vsub.f32 %v591, %v639
        %v688 = vsub.f32 %v592, %v640
        %v689 = vsub.f32 %v593, %v641
        %v690 = vsub.f32 %v594, %v642
        %v691 = vsub.f32 %v595, %v643
        %v692 = vsub.f32 %v596, %v644
        %v693 = vsub.f32 %v597, %v645
        %v694 = vsub.f32 %v598, %v646
        %v695 = vsub.f32 %v599, %v647
        %v696 = vsub.f32 %v600, %v648
        %v697 = vsub.f32 %v601, %v649
        %v698 = vsub.f32 %v602, %v650
        %v699 = vsub.f32 %v603, %v651
        %v700 = vsub.f32 %v604, %v652
        %v701 = vsub.f32 %v605, %v653
        %v702 = vsub.f32 %v606, %v654
        %v703 = vsub.f32 %v607, %v655
        %v704 = vsub.f32 %v608, %v656
        %v705 = vsub.f32 %v609, %v657
        %v706 = vsub.f32 %v610, %v658
        %v707 = vsub.f32 %v611, %v659
        %v708 = vsub.f32 %v612, %v660
        %v709 = vsub.f32 %v613, %v661
        %v710 = vsub.f32 %v614, %v662
        %v711 = vsub.f32 %v615, %v663
        %v712 = vsub.f32 %v616, %v664
        %v713 = vsub.f32 %v617, %v665
        %v714 = vsub.f32 %v618, %v666
        %v715 = vsub.f32 %v619, %v667
        %v716 = vsub.f32 %v620, %v668
        %v717 = vsub.f32 %v621, %v669
        %v718 = vsub.f32 %v622, %v670
        %v719 = vsub.f32 %v623, %v671
        %v720 = vsub.f32 %v624, %v672
        %v721 = vsub.f32 %v625, %v673
        %v722 = vsub.f32 %v626, %v674
        %v723 = vsub.f32 %v627, %v675
        %v724 = vsub.f32 %v628, %v676
        %v725 = vsub.f32 %v629, %v677
        %v726 = vsub.f32 %v630, %v678
        %v727 = vsub.f32 %v631, %v679
        %v728 = vsub.f32 %v632, %v680
        %v729 = vand.u32 2147483647, %v681
        %v730 = vand.u32 2147483647, %v682
        %v731 = vand.u32 2147483647, %v683
        %v732 = vand.u32 2147483647, %v684
        %v733 = vand.u32 2147483647, %v685
        %v734 = vand.u32 2147483647, %v686
        %v735 = vand.u32 2147483647, %v687
        %v736 = vand.u32 2147483647, %v688
        %v737 = vand.u32 2147483647, %v689
        %v738 = vand.u32 2147483647, %v690
        %v739 = vand.u32 2147483647, %v691
        %v740 = vand.u32 2147483647, %v692
        %v741 = vand.u32 2147483647, %v693
        %v742 = vand.u32 2147483647, %v694
        %v743 = vand.u32 2147483647, %v695
        %v744 = vand.u32 2147483647, %v696
        %v745 = vand.u32 2147483647, %v697
        %v746 = vand.u32 2147483647, %v698
        %v747 = vand.u32 2147483647, %v699
        %v748 = vand.u32 2147483647, %v700
        %v749 = vand.u32 2147483647, %v701
        %v750 = vand.u32 2147483647, %v702
        %v751 = vand.u32 2147483647, %v703
        %v752 = vand.u32 2147483647, %v704
        %v753 = vand.u32 2147483647, %v705
        %v754 = vand.u32 2147483647, %v706
        %v755 = vand.u32 2147483647, %v707
        %v756 = vand.u32 2147483647, %v708
        %v757 = vand.u32 2147483647, %v709
        %v758 = vand.u32 2147483647, %v710
        %v759 = vand.u32 2147483647, %v711
        %v760 = vand.u32 2147483647, %v712
        %v761 = vand.u32 2147483647, %v713
        %v762 = vand.u32 2147483647, %v714
        %v763 = vand.u32 2147483647, %v715
        %v764 = vand.u32 2147483647, %v716
        %v765 = vand.u32 2147483647, %v717
        %v766 = vand.u32 2147483647, %v718
        %v767 = vand.u32 2147483647, %v719
        %v768 = vand.u32 2147483647, %v720
        %v769 = vand.u32 2147483647, %v721
        %v770 = vand.u32 2147483647, %v722
        %v771 = vand.u32 2147483647, %v723
        %v772 = vand.u32 2147483647, %v724
        %v773 = vand.u32 2147483647, %v725
        %v774 = vand.u32 2147483647, %v726
        %v775 = vand.u32 2147483647, %v727
        %v776 = vand.u32 2147483647, %v728
        %v777 = vrot.slane %v729, 4
        %v778 = vadd.f32 %v729, %v777
        %v779 = vrot.slane %v778, 2
        %v780 = vadd.f32 %v778, %v779
        %v781 = vrot.slane %v780, 1
        %v782 = vadd.f32 %v780, %v781
        %v783 = vrot.slane %v730, 4
        %v784 = vadd.f32 %v730, %v783
        %v785 = vrot.slane %v784, 2
        %v786 = vadd.f32 %v784, %v785
        %v787 = vrot.slane %v786, 1
        %v788 = vadd.f32 %v786, %v787
        %v789 = vrot.slane %v731, 4
        %v790 = vadd.f32 %v731, %v789
        %v791 = vrot.slane %v790, 2
        %v792 = vadd.f32 %v790, %v791
        %v793 = vrot.slane %v792, 1
        %v794 = vadd.f32 %v792, %v793
        %v795 = vrot.slane %v732, 4
        %v796 = vadd.f32 %v732, %v795
        %v797 = vrot.slane %v796, 2
        %v798 = vadd.f32 %v796, %v797
        %v799 = vrot.slane %v798, 1
        %v800 = vadd.f32 %v798, %v799
        %v801 = vrot.slane %v733, 4
        %v802 = vadd.f32 %v733, %v801
        %v803 = vrot.slane %v802, 2
        %v804 = vadd.f32 %v802, %v803
        %v805 = vrot.slane %v804, 1
        %v806 = vadd.f32 %v804, %v805
        %v807 = vrot.slane %v734, 4
        %v808 = vadd.f32 %v734, %v807
        %v809 = vrot.slane %v808, 2
        %v810 = vadd.f32 %v808, %v809
        %v811 = vrot.slane %v810, 1
        %v812 = vadd.f32 %v810, %v811
        %v813 = vrot.slane %v735, 4
        %v814 = vadd.f32 %v735, %v813
        %v815 = vrot.slane %v814, 2
        %v816 = vadd.f32 %v814, %v815
        %v817 = vrot.slane %v816, 1
        %v818 = vadd.f32 %v816, %v817
        %v819 = vrot.slane %v736, 4
        %v820 = vadd.f32 %v736, %v819
        %v821 = vrot.slane %v820, 2
        %v822 = vadd.f32 %v820, %v821
        %v823 = vrot.slane %v822, 1
        %v824 = vadd.f32 %v822, %v823
        %v825 = vrot.slane %v737, 4
        %v826 = vadd.f32 %v737, %v825
        %v827 = vrot.slane %v826, 2
        %v828 = vadd.f32 %v826, %v827
        %v829 = vrot.slane %v828, 1
        %v830 = vadd.f32 %v828, %v829
        %v831 = vrot.slane %v738, 4
        %v832 = vadd.f32 %v738, %v831
        %v833 = vrot.slane %v832, 2
        %v834 = vadd.f32 %v832, %v833
        %v835 = vrot.slane %v834, 1
        %v836 = vadd.f32 %v834, %v835
        %v837 = vrot.slane %v739, 4
        %v838 = vadd.f32 %v739, %v837
        %v839 = vrot.slane %v838, 2
        %v840 = vadd.f32 %v838, %v839
        %v841 = vrot.slane %v840, 1
        %v842 = vadd.f32 %v840, %v841
        %v843 = vrot.slane %v740, 4
        %v844 = vadd.f32 %v740, %v843
        %v845 = vrot.slane %v844, 2
        %v846 = vadd.f32 %v844, %v845
        %v847 = vrot.slane %v846, 1
        %v848 = vadd.f32 %v846, %v847
        %v849 = vrot.slane %v741, 4
        %v850 = vadd.f32 %v741, %v849
        %v851 = vrot.slane %v850, 2
        %v852 = vadd.f32 %v850, %v851
        %v853 = vrot.slane %v852, 1
        %v854 = vadd.f32 %v852, %v853
        %v855 = vrot.slane %v742, 4
        %v856 = vadd.f32 %v742, %v855
        %v857 = vrot.slane %v856, 2
        %v858 = vadd.f32 %v856, %v857
        %v859 = vrot.slane %v858, 1
        %v860 = vadd.f32 %v858, %v859
        %v861 = vrot.slane %v743, 4
        %v862 = vadd.f32 %v743, %v861
        %v863 = vrot.slane %v862, 2
        %v864 = vadd.f32 %v862, %v863
        %v865 = vrot.slane %v864, 1
        %v866 = vadd.f32 %v864, %v865
        %v867 = vrot.slane %v744, 4
        %v868 = vadd.f32 %v744, %v867
        %v869 = vrot.slane %v868, 2
        %v870 = vadd.f32 %v868, %v869
        %v871 = vrot.slane %v870, 1
        %v872 = vadd.f32 %v870, %v871
        %v873 = vrot.slane %v745, 4
        %v874 = vadd.f32 %v745, %v873
        %v875 = vrot.slane %v874, 2
        %v876 = vadd.f32 %v874, %v875
        %v877 = vrot.slane %v876, 1
        %v878 = vadd.f32 %v876, %v877
        %v879 = vrot.slane %v746, 4
        %v880 = vadd.f32 %v746, %v879
        %v881 = vrot.slane %v880, 2
        %v882 = vadd.f32 %v880, %v881
        %v883 = vrot.slane %v882, 1
        %v884 = vadd.f32 %v882, %v883
        %v885 = vrot.slane %v747, 4
        %v886 = vadd.f32 %v747, %v885
        %v887 = vrot.slane %v886, 2
        %v888 = vadd.f32 %v886, %v887
        %v889 = vrot.slane %v888, 1
        %v890 = vadd.f32 %v888, %v889
        %v891 = vrot.slane %v748, 4
        %v892 = vadd.f32 %v748, %v891
        %v893 = vrot.slane %v892, 2
        %v894 = vadd.f32 %v892, %v893
        %v895 = vrot.slane %v894, 1
        %v896 = vadd.f32 %v894, %v895
        %v897 = vrot.slane %v749, 4
        %v898 = vadd.f32 %v749, %v897
        %v899 = vrot.slane %v898, 2
        %v900 = vadd.f32 %v898, %v899
        %v901 = vrot.slane %v900, 1
        %v902 = vadd.f32 %v900, %v901
        %v903 = vrot.slane %v750, 4
        %v904 = vadd.f32 %v750, %v903
        %v905 = vrot.slane %v904, 2
        %v906 = vadd.f32 %v904, %v905
        %v907 = vrot.slane %v906, 1
        %v908 = vadd.f32 %v906, %v907
        %v909 = vrot.slane %v751, 4
        %v910 = vadd.f32 %v751, %v909
        %v911 = vrot.slane %v910, 2
        %v912 = vadd.f32 %v910, %v911
        %v913 = vrot.slane %v912, 1
        %v914 = vadd.f32 %v912, %v913
        %v915 = vrot.slane %v752, 4
        %v916 = vadd.f32 %v752, %v915
        %v917 = vrot.slane %v916, 2
        %v918 = vadd.f32 %v916, %v917
        %v919 = vrot.slane %v918, 1
        %v920 = vadd.f32 %v918, %v919
        %v921 = vrot.slane %v753, 4
        %v922 = vadd.f32 %v753, %v921
        %v923 = vrot.slane %v922, 2
        %v924 = vadd.f32 %v922, %v923
        %v925 = vrot.slane %v924, 1
        %v926 = vadd.f32 %v924, %v925
        %v927 = vrot.slane %v754, 4
        %v928 = vadd.f32 %v754, %v927
        %v929 = vrot.slane %v928, 2
        %v930 = vadd.f32 %v928, %v929
        %v931 = vrot.slane %v930, 1
        %v932 = vadd.f32 %v930, %v931
        %v933 = vrot.slane %v755, 4
        %v934 = vadd.f32 %v755, %v933
        %v935 = vrot.slane %v934, 2
        %v936 = vadd.f32 %v934, %v935
        %v937 = vrot.slane %v936, 1
        %v938 = vadd.f32 %v936, %v937
        %v939 = vrot.slane %v756, 4
        %v940 = vadd.f32 %v756, %v939
        %v941 = vrot.slane %v940, 2
        %v942 = vadd.f32 %v940, %v941
        %v943 = vrot.slane %v942, 1
        %v944 = vadd.f32 %v942, %v943
        %v945 = vrot.slane %v757, 4
        %v946 = vadd.f32 %v757, %v945
        %v947 = vrot.slane %v946, 2
        %v948 = vadd.f32 %v946, %v947
        %v949 = vrot.slane %v948, 1
        %v950 = vadd.f32 %v948, %v949
        %v951 = vrot.slane %v758, 4
        %v952 = vadd.f32 %v758, %v951
        %v953 = vrot.slane %v952, 2
        %v954 = vadd.f32 %v952, %v953
        %v955 = vrot.slane %v954, 1
        %v956 = vadd.f32 %v954, %v955
        %v957 = vrot.slane %v759, 4
        %v958 = vadd.f32 %v759, %v957
        %v959 = vrot.slane %v958, 2
        %v960 = vadd.f32 %v958, %v959
        %v961 = vrot.slane %v960, 1
        %v962 = vadd.f32 %v960, %v961
        %v963 = vrot.slane %v760, 4
        %v964 = vadd.f32 %v760, %v963
        %v965 = vrot.slane %v964, 2
        %v966 = vadd.f32 %v964, %v965
        %v967 = vrot.slane %v966, 1
        %v968 = vadd.f32 %v966, %v967
        %v969 = vrot.slane %v761, 4
        %v970 = vadd.f32 %v761, %v969
        %v971 = vrot.slane %v970, 2
        %v972 = vadd.f32 %v970, %v971
        %v973 = vrot.slane %v972, 1
        %v974 = vadd.f32 %v972, %v973
        %v975 = vrot.slane %v762, 4
        %v976 = vadd.f32 %v762, %v975
        %v977 = vrot.slane %v976, 2
        %v978 = vadd.f32 %v976, %v977
        %v979 = vrot.slane %v978, 1
        %v980 = vadd.f32 %v978, %v979
        %v981 = vrot.slane %v763, 4
        %v982 = vadd.f32 %v763, %v981
        %v983 = vrot.slane %v982, 2
        %v984 = vadd.f32 %v982, %v983
        %v985 = vrot.slane %v984, 1
        %v986 = vadd.f32 %v984, %v985
        %v987 = vrot.slane %v764, 4
        %v988 = vadd.f32 %v764, %v987
        %v989 = vrot.slane %v988, 2
        %v990 = vadd.f32 %v988, %v989
        %v991 = vrot.slane %v990, 1
        %v992 = vadd.f32 %v990, %v991
        %v993 = vrot.slane %v765, 4
        %v994 = vadd.f32 %v765, %v993
        %v995 = vrot.slane %v994, 2
        %v996 = vadd.f32 %v994, %v995
        %v997 = vrot.slane %v996, 1
        %v998 = vadd.f32 %v996, %v997
        %v999 = vrot.slane %v766, 4
        %v1000 = vadd.f32 %v766, %v999
        %v1001 = vrot.slane %v1000, 2
        %v1002 = vadd.f32 %v1000, %v1001
        %v1003 = vrot.slane %v1002, 1
        %v1004 = vadd.f32 %v1002, %v1003
        %v1005 = vrot.slane %v767, 4
        %v1006 = vadd.f32 %v767, %v1005
        %v1007 = vrot.slane %v1006, 2
        %v1008 = vadd.f32 %v1006, %v1007
        %v1009 = vrot.slane %v1008, 1
        %v1010 = vadd.f32 %v1008, %v1009
        %v1011 = vrot.slane %v768, 4
        %v1012 = vadd.f32 %v768, %v1011
        %v1013 = vrot.slane %v1012, 2
        %v1014 = vadd.f32 %v1012, %v1013
        %v1015 = vrot.slane %v1014, 1
        %v1016 = vadd.f32 %v1014, %v1015
        %v1017 = vrot.slane %v769, 4
        %v1018 = vadd.f32 %v769, %v1017
        %v1019 = vrot.slane %v1018, 2
        %v1020 = vadd.f32 %v1018, %v1019
        %v1021 = vrot.slane %v1020, 1
        %v1022 = vadd.f32 %v1020, %v1021
        %v1023 = vrot.slane %v770, 4
        %v1024 = vadd.f32 %v770, %v1023
        %v1025 = vrot.slane %v1024, 2
        %v1026 = vadd.f32 %v1024, %v1025
        %v1027 = vrot.slane %v1026, 1
        %v1028 = vadd.f32 %v1026, %v1027
        %v1029 = vrot.slane %v771, 4
        %v1030 = vadd.f32 %v771, %v1029
        %v1031 = vrot.slane %v1030, 2
        %v1032 = vadd.f32 %v1030, %v1031
        %v1033 = vrot.slane %v1032, 1
        %v1034 = vadd.f32 %v1032, %v1033
        %v1035 = vrot.slane %v772, 4
        %v1036 = vadd.f32 %v772, %v1035
        %v1037 = vrot.slane %v1036, 2
        %v1038 = vadd.f32 %v1036, %v1037
        %v1039 = vrot.slane %v1038, 1
        %v1040 = vadd.f32 %v1038, %v1039
        %v1041 = vrot.slane %v773, 4
        %v1042 = vadd.f32 %v773, %v1041
        %v1043 = vrot.slane %v1042, 2
        %v1044 = vadd.f32 %v1042, %v1043
        %v1045 = vrot.slane %v1044, 1
        %v1046 = vadd.f32 %v1044, %v1045
        %v1047 = vrot.slane %v774, 4
        %v1048 = vadd.f32 %v774, %v1047
        %v1049 = vrot.slane %v1048, 2
        %v1050 = vadd.f32 %v1048, %v1049
        %v1051 = vrot.slane %v1050, 1
        %v1052 = vadd.f32 %v1050, %v1051
        %v1053 = vrot.slane %v775, 4
        %v1054 = vadd.f32 %v775, %v1053
        %v1055 = vrot.slane %v1054, 2
        %v1056 = vadd.f32 %v1054, %v1055
        %v1057 = vrot.slane %v1056, 1
        %v1058 = vadd.f32 %v1056, %v1057
        %v1059 = vrot.slane %v776, 4
        %v1060 = vadd.f32 %v776, %v1059
        %v1061 = vrot.slane %v1060, 2
        %v1062 = vadd.f32 %v1060, %v1061
        %v1063 = vrot.slane %v1062, 1
        %v1064 = vadd.f32 %v1062, %v1063
        %v1065 = vld [vmem:[%s552 + $0xc0] sm:$0xf]
        %v1066 = vld [vmem:[%s552 + $0xc8] sm:$0xf]
        %v1067 = vld [vmem:[%s552 + $0xd0] sm:$0xf]
        %v1068 = vld [vmem:[%s552 + $0xd8] sm:$0xf]
        %v1069 = vld [vmem:[%s552 + $0xe0] sm:$0xf]
        %v1070 = vld [vmem:[%s552 + $0xe8] sm:$0xf]
        %v1071 = vld [vmem:[%s552 + $0xf0] sm:$0xf]
        %v1072 = vld [vmem:[%s552 + $0xf8] sm:$0xf]
        %v1073 = vld [vmem:[%s552 + $0x100] sm:$0xf]
        %v1074 = vld [vmem:[%s552 + $0x108] sm:$0xf]
        %v1075 = vld [vmem:[%s552 + $0x110] sm:$0xf]
        %v1076 = vld [vmem:[%s552 + $0x118] sm:$0xf]
        %v1077 = vld [vmem:[%s552 + $0x120] sm:$0xf]
        %v1078 = vld [vmem:[%s552 + $0x128] sm:$0xf]
        %v1079 = vld [vmem:[%s552 + $0x130] sm:$0xf]
        %v1080 = vld [vmem:[%s552 + $0x138] sm:$0xf]
        %v1081 = vld [vmem:[%s552 + $0x140] sm:$0xf]
        %v1082 = vld [vmem:[%s552 + $0x148] sm:$0xf]
        %v1083 = vld [vmem:[%s552 + $0x150] sm:$0xf]
        %v1084 = vld [vmem:[%s552 + $0x158] sm:$0xf]
        %v1085 = vld [vmem:[%s552 + $0x160] sm:$0xf]
        %v1086 = vld [vmem:[%s552 + $0x168] sm:$0xf]
        %v1087 = vld [vmem:[%s552 + $0x170] sm:$0xf]
        %v1088 = vld [vmem:[%s552 + $0x178] sm:$0xf]
        %v1089 = vld [vmem:[%s552 + $0x240] sm:$0xf]
        %v1090 = vld [vmem:[%s552 + $0x248] sm:$0xf]
        %v1091 = vld [vmem:[%s552 + $0x250] sm:$0xf]
        %v1092 = vld [vmem:[%s552 + $0x258] sm:$0xf]
        %v1093 = vld [vmem:[%s552 + $0x260] sm:$0xf]
        %v1094 = vld [vmem:[%s552 + $0x268] sm:$0xf]
        %v1095 = vld [vmem:[%s552 + $0x270] sm:$0xf]
        %v1096 = vld [vmem:[%s552 + $0x278] sm:$0xf]
        %v1097 = vld [vmem:[%s552 + $0x280] sm:$0xf]
        %v1098 = vld [vmem:[%s552 + $0x288] sm:$0xf]
        %v1099 = vld [vmem:[%s552 + $0x290] sm:$0xf]
        %v1100 = vld [vmem:[%s552 + $0x298] sm:$0xf]
        %v1101 = vld [vmem:[%s552 + $0x2a0] sm:$0xf]
        %v1102 = vld [vmem:[%s552 + $0x2a8] sm:$0xf]
        %v1103 = vld [vmem:[%s552 + $0x2b0] sm:$0xf]
        %v1104 = vld [vmem:[%s552 + $0x2b8] sm:$0xf]
        %v1105 = vld [vmem:[%s552 + $0x2c0] sm:$0xf]
        %v1106 = vld [vmem:[%s552 + $0x2c8] sm:$0xf]
        %v1107 = vld [vmem:[%s552 + $0x2d0] sm:$0xf]
        %v1108 = vld [vmem:[%s552 + $0x2d8] sm:$0xf]
        %v1109 = vld [vmem:[%s552 + $0x2e0] sm:$0xf]
        %v1110 = vld [vmem:[%s552 + $0x2e8] sm:$0xf]
        %v1111 = vld [vmem:[%s552 + $0x2f0] sm:$0xf]
        %v1112 = vld [vmem:[%s552 + $0x2f8] sm:$0xf]
        %v1113 = vld [vmem:[%s559 + $0xc0] sm:$0xf]
        %v1114 = vld [vmem:[%s559 + $0xc8] sm:$0xf]
        %v1115 = vld [vmem:[%s559 + $0xd0] sm:$0xf]
        %v1116 = vld [vmem:[%s559 + $0xd8] sm:$0xf]
        %v1117 = vld [vmem:[%s559 + $0xe0] sm:$0xf]
        %v1118 = vld [vmem:[%s559 + $0xe8] sm:$0xf]
        %v1119 = vld [vmem:[%s559 + $0xf0] sm:$0xf]
        %v1120 = vld [vmem:[%s559 + $0xf8] sm:$0xf]
        %v1121 = vld [vmem:[%s559 + $0x100] sm:$0xf]
        %v1122 = vld [vmem:[%s559 + $0x108] sm:$0xf]
        %v1123 = vld [vmem:[%s559 + $0x110] sm:$0xf]
        %v1124 = vld [vmem:[%s559 + $0x118] sm:$0xf]
        %v1125 = vld [vmem:[%s559 + $0x120] sm:$0xf]
        %v1126 = vld [vmem:[%s559 + $0x128] sm:$0xf]
        %v1127 = vld [vmem:[%s559 + $0x130] sm:$0xf]
        %v1128 = vld [vmem:[%s559 + $0x138] sm:$0xf]
        %v1129 = vld [vmem:[%s559 + $0x140] sm:$0xf]
        %v1130 = vld [vmem:[%s559 + $0x148] sm:$0xf]
        %v1131 = vld [vmem:[%s559 + $0x150] sm:$0xf]
        %v1132 = vld [vmem:[%s559 + $0x158] sm:$0xf]
        %v1133 = vld [vmem:[%s559 + $0x160] sm:$0xf]
        %v1134 = vld [vmem:[%s559 + $0x168] sm:$0xf]
        %v1135 = vld [vmem:[%s559 + $0x170] sm:$0xf]
        %v1136 = vld [vmem:[%s559 + $0x178] sm:$0xf]
        %v1137 = vld [vmem:[%s559 + $0x240] sm:$0xf]
        %v1138 = vld [vmem:[%s559 + $0x248] sm:$0xf]
        %v1139 = vld [vmem:[%s559 + $0x250] sm:$0xf]
        %v1140 = vld [vmem:[%s559 + $0x258] sm:$0xf]
        %v1141 = vld [vmem:[%s559 + $0x260] sm:$0xf]
        %v1142 = vld [vmem:[%s559 + $0x268] sm:$0xf]
        %v1143 = vld [vmem:[%s559 + $0x270] sm:$0xf]
        %v1144 = vld [vmem:[%s559 + $0x278] sm:$0xf]
        %v1145 = vld [vmem:[%s559 + $0x280] sm:$0xf]
        %v1146 = vld [vmem:[%s559 + $0x288] sm:$0xf]
        %v1147 = vld [vmem:[%s559 + $0x290] sm:$0xf]
        %v1148 = vld [vmem:[%s559 + $0x298] sm:$0xf]
        %v1149 = vld [vmem:[%s559 + $0x2a0] sm:$0xf]
        %v1150 = vld [vmem:[%s559 + $0x2a8] sm:$0xf]
        %v1151 = vld [vmem:[%s559 + $0x2b0] sm:$0xf]
        %v1152 = vld [vmem:[%s559 + $0x2b8] sm:$0xf]
        %v1153 = vld [vmem:[%s559 + $0x2c0] sm:$0xf]
        %v1154 = vld [vmem:[%s559 + $0x2c8] sm:$0xf]
        %v1155 = vld [vmem:[%s559 + $0x2d0] sm:$0xf]
        %v1156 = vld [vmem:[%s559 + $0x2d8] sm:$0xf]
        %v1157 = vld [vmem:[%s559 + $0x2e0] sm:$0xf]
        %v1158 = vld [vmem:[%s559 + $0x2e8] sm:$0xf]
        %v1159 = vld [vmem:[%s559 + $0x2f0] sm:$0xf]
        %v1160 = vld [vmem:[%s559 + $0x2f8] sm:$0xf]
        %v1161 = vsub.f32 %v1065, %v1113
        %v1162 = vsub.f32 %v1066, %v1114
        %v1163 = vsub.f32 %v1067, %v1115
        %v1164 = vsub.f32 %v1068, %v1116
        %v1165 = vsub.f32 %v1069, %v1117
        %v1166 = vsub.f32 %v1070, %v1118
        %v1167 = vsub.f32 %v1071, %v1119
        %v1168 = vsub.f32 %v1072, %v1120
        %v1169 = vsub.f32 %v1073, %v1121
        %v1170 = vsub.f32 %v1074, %v1122
        %v1171 = vsub.f32 %v1075, %v1123
        %v1172 = vsub.f32 %v1076, %v1124
        %v1173 = vsub.f32 %v1077, %v1125
        %v1174 = vsub.f32 %v1078, %v1126
        %v1175 = vsub.f32 %v1079, %v1127
        %v1176 = vsub.f32 %v1080, %v1128
        %v1177 = vsub.f32 %v1081, %v1129
        %v1178 = vsub.f32 %v1082, %v1130
        %v1179 = vsub.f32 %v1083, %v1131
        %v1180 = vsub.f32 %v1084, %v1132
        %v1181 = vsub.f32 %v1085, %v1133
        %v1182 = vsub.f32 %v1086, %v1134
        %v1183 = vsub.f32 %v1087, %v1135
        %v1184 = vsub.f32 %v1088, %v1136
        %v1185 = vsub.f32 %v1089, %v1137
        %v1186 = vsub.f32 %v1090, %v1138
        %v1187 = vsub.f32 %v1091, %v1139
        %v1188 = vsub.f32 %v1092, %v1140
        %v1189 = vsub.f32 %v1093, %v1141
        %v1190 = vsub.f32 %v1094, %v1142
        %v1191 = vsub.f32 %v1095, %v1143
        %v1192 = vsub.f32 %v1096, %v1144
        %v1193 = vsub.f32 %v1097, %v1145
        %v1194 = vsub.f32 %v1098, %v1146
        %v1195 = vsub.f32 %v1099, %v1147
        %v1196 = vsub.f32 %v1100, %v1148
        %v1197 = vsub.f32 %v1101, %v1149
        %v1198 = vsub.f32 %v1102, %v1150
        %v1199 = vsub.f32 %v1103, %v1151
        %v1200 = vsub.f32 %v1104, %v1152
        %v1201 = vsub.f32 %v1105, %v1153
        %v1202 = vsub.f32 %v1106, %v1154
        %v1203 = vsub.f32 %v1107, %v1155
        %v1204 = vsub.f32 %v1108, %v1156
        %v1205 = vsub.f32 %v1109, %v1157
        %v1206 = vsub.f32 %v1110, %v1158
        %v1207 = vsub.f32 %v1111, %v1159
        %v1208 = vsub.f32 %v1112, %v1160
        %v1209 = vand.u32 2147483647, %v1161
        %v1210 = vand.u32 2147483647, %v1162
        %v1211 = vand.u32 2147483647, %v1163
        %v1212 = vand.u32 2147483647, %v1164
        %v1213 = vand.u32 2147483647, %v1165
        %v1214 = vand.u32 2147483647, %v1166
        %v1215 = vand.u32 2147483647, %v1167
        %v1216 = vand.u32 2147483647, %v1168
        %v1217 = vand.u32 2147483647, %v1169
        %v1218 = vand.u32 2147483647, %v1170
        %v1219 = vand.u32 2147483647, %v1171
        %v1220 = vand.u32 2147483647, %v1172
        %v1221 = vand.u32 2147483647, %v1173
        %v1222 = vand.u32 2147483647, %v1174
        %v1223 = vand.u32 2147483647, %v1175
        %v1224 = vand.u32 2147483647, %v1176
        %v1225 = vand.u32 2147483647, %v1177
        %v1226 = vand.u32 2147483647, %v1178
        %v1227 = vand.u32 2147483647, %v1179
        %v1228 = vand.u32 2147483647, %v1180
        %v1229 = vand.u32 2147483647, %v1181
        %v1230 = vand.u32 2147483647, %v1182
        %v1231 = vand.u32 2147483647, %v1183
        %v1232 = vand.u32 2147483647, %v1184
        %v1233 = vand.u32 2147483647, %v1185
        %v1234 = vand.u32 2147483647, %v1186
        %v1235 = vand.u32 2147483647, %v1187
        %v1236 = vand.u32 2147483647, %v1188
        %v1237 = vand.u32 2147483647, %v1189
        %v1238 = vand.u32 2147483647, %v1190
        %v1239 = vand.u32 2147483647, %v1191
        %v1240 = vand.u32 2147483647, %v1192
        %v1241 = vand.u32 2147483647, %v1193
        %v1242 = vand.u32 2147483647, %v1194
        %v1243 = vand.u32 2147483647, %v1195
        %v1244 = vand.u32 2147483647, %v1196
        %v1245 = vand.u32 2147483647, %v1197
        %v1246 = vand.u32 2147483647, %v1198
        %v1247 = vand.u32 2147483647, %v1199
        %v1248 = vand.u32 2147483647, %v1200
        %v1249 = vand.u32 2147483647, %v1201
        %v1250 = vand.u32 2147483647, %v1202
        %v1251 = vand.u32 2147483647, %v1203
        %v1252 = vand.u32 2147483647, %v1204
        %v1253 = vand.u32 2147483647, %v1205
        %v1254 = vand.u32 2147483647, %v1206
        %v1255 = vand.u32 2147483647, %v1207
        %v1256 = vand.u32 2147483647, %v1208
        %vm1257 = vcmask 1043456
        %v1258 = vsel %vm1257, %v1209, 0.0
        %v1259 = vrot.slane %v1258, 4
        %v1260 = vadd.f32 %v1258, %v1259
        %v1261 = vrot.slane %v1260, 2
        %v1262 = vadd.f32 %v1260, %v1261
        %v1263 = vrot.slane %v1262, 1
        %v1264 = vadd.f32 %v1262, %v1263
        %v1265 = vsel %vm1257, %v1210, 0.0
        %v1266 = vrot.slane %v1265, 4
        %v1267 = vadd.f32 %v1265, %v1266
        %v1268 = vrot.slane %v1267, 2
        %v1269 = vadd.f32 %v1267, %v1268
        %v1270 = vrot.slane %v1269, 1
        %v1271 = vadd.f32 %v1269, %v1270
        %v1272 = vsel %vm1257, %v1211, 0.0
        %v1273 = vrot.slane %v1272, 4
        %v1274 = vadd.f32 %v1272, %v1273
        %v1275 = vrot.slane %v1274, 2
        %v1276 = vadd.f32 %v1274, %v1275
        %v1277 = vrot.slane %v1276, 1
        %v1278 = vadd.f32 %v1276, %v1277
        %v1279 = vsel %vm1257, %v1212, 0.0
        %v1280 = vrot.slane %v1279, 4
        %v1281 = vadd.f32 %v1279, %v1280
        %v1282 = vrot.slane %v1281, 2
        %v1283 = vadd.f32 %v1281, %v1282
        %v1284 = vrot.slane %v1283, 1
        %v1285 = vadd.f32 %v1283, %v1284
        %v1286 = vsel %vm1257, %v1213, 0.0
        %v1287 = vrot.slane %v1286, 4
        %v1288 = vadd.f32 %v1286, %v1287
        %v1289 = vrot.slane %v1288, 2
        %v1290 = vadd.f32 %v1288, %v1289
        %v1291 = vrot.slane %v1290, 1
        %v1292 = vadd.f32 %v1290, %v1291
        %v1293 = vsel %vm1257, %v1214, 0.0
        %v1294 = vrot.slane %v1293, 4
        %v1295 = vadd.f32 %v1293, %v1294
        %v1296 = vrot.slane %v1295, 2
        %v1297 = vadd.f32 %v1295, %v1296
        %v1298 = vrot.slane %v1297, 1
        %v1299 = vadd.f32 %v1297, %v1298
        %v1300 = vsel %vm1257, %v1215, 0.0
        %v1301 = vrot.slane %v1300, 4
        %v1302 = vadd.f32 %v1300, %v1301
        %v1303 = vrot.slane %v1302, 2
        %v1304 = vadd.f32 %v1302, %v1303
        %v1305 = vrot.slane %v1304, 1
        %v1306 = vadd.f32 %v1304, %v1305
        %v1307 = vsel %vm1257, %v1216, 0.0
        %v1308 = vrot.slane %v1307, 4
        %v1309 = vadd.f32 %v1307, %v1308
        %v1310 = vrot.slane %v1309, 2
        %v1311 = vadd.f32 %v1309, %v1310
        %v1312 = vrot.slane %v1311, 1
        %v1313 = vadd.f32 %v1311, %v1312
        %v1314 = vsel %vm1257, %v1217, 0.0
        %v1315 = vrot.slane %v1314, 4
        %v1316 = vadd.f32 %v1314, %v1315
        %v1317 = vrot.slane %v1316, 2
        %v1318 = vadd.f32 %v1316, %v1317
        %v1319 = vrot.slane %v1318, 1
        %v1320 = vadd.f32 %v1318, %v1319
        %v1321 = vsel %vm1257, %v1218, 0.0
        %v1322 = vrot.slane %v1321, 4
        %v1323 = vadd.f32 %v1321, %v1322
        %v1324 = vrot.slane %v1323, 2
        %v1325 = vadd.f32 %v1323, %v1324
        %v1326 = vrot.slane %v1325, 1
        %v1327 = vadd.f32 %v1325, %v1326
        %v1328 = vsel %vm1257, %v1219, 0.0
        %v1329 = vrot.slane %v1328, 4
        %v1330 = vadd.f32 %v1328, %v1329
        %v1331 = vrot.slane %v1330, 2
        %v1332 = vadd.f32 %v1330, %v1331
        %v1333 = vrot.slane %v1332, 1
        %v1334 = vadd.f32 %v1332, %v1333
        %v1335 = vsel %vm1257, %v1220, 0.0
        %v1336 = vrot.slane %v1335, 4
        %v1337 = vadd.f32 %v1335, %v1336
        %v1338 = vrot.slane %v1337, 2
        %v1339 = vadd.f32 %v1337, %v1338
        %v1340 = vrot.slane %v1339, 1
        %v1341 = vadd.f32 %v1339, %v1340
        %v1342 = vsel %vm1257, %v1221, 0.0
        %v1343 = vrot.slane %v1342, 4
        %v1344 = vadd.f32 %v1342, %v1343
        %v1345 = vrot.slane %v1344, 2
        %v1346 = vadd.f32 %v1344, %v1345
        %v1347 = vrot.slane %v1346, 1
        %v1348 = vadd.f32 %v1346, %v1347
        %v1349 = vsel %vm1257, %v1222, 0.0
        %v1350 = vrot.slane %v1349, 4
        %v1351 = vadd.f32 %v1349, %v1350
        %v1352 = vrot.slane %v1351, 2
        %v1353 = vadd.f32 %v1351, %v1352
        %v1354 = vrot.slane %v1353, 1
        %v1355 = vadd.f32 %v1353, %v1354
        %v1356 = vsel %vm1257, %v1223, 0.0
        %v1357 = vrot.slane %v1356, 4
        %v1358 = vadd.f32 %v1356, %v1357
        %v1359 = vrot.slane %v1358, 2
        %v1360 = vadd.f32 %v1358, %v1359
        %v1361 = vrot.slane %v1360, 1
        %v1362 = vadd.f32 %v1360, %v1361
        %v1363 = vsel %vm1257, %v1224, 0.0
        %v1364 = vrot.slane %v1363, 4
        %v1365 = vadd.f32 %v1363, %v1364
        %v1366 = vrot.slane %v1365, 2
        %v1367 = vadd.f32 %v1365, %v1366
        %v1368 = vrot.slane %v1367, 1
        %v1369 = vadd.f32 %v1367, %v1368
        %v1370 = vsel %vm1257, %v1225, 0.0
        %v1371 = vrot.slane %v1370, 4
        %v1372 = vadd.f32 %v1370, %v1371
        %v1373 = vrot.slane %v1372, 2
        %v1374 = vadd.f32 %v1372, %v1373
        %v1375 = vrot.slane %v1374, 1
        %v1376 = vadd.f32 %v1374, %v1375
        %v1377 = vsel %vm1257, %v1226, 0.0
        %v1378 = vrot.slane %v1377, 4
        %v1379 = vadd.f32 %v1377, %v1378
        %v1380 = vrot.slane %v1379, 2
        %v1381 = vadd.f32 %v1379, %v1380
        %v1382 = vrot.slane %v1381, 1
        %v1383 = vadd.f32 %v1381, %v1382
        %v1384 = vsel %vm1257, %v1227, 0.0
        %v1385 = vrot.slane %v1384, 4
        %v1386 = vadd.f32 %v1384, %v1385
        %v1387 = vrot.slane %v1386, 2
        %v1388 = vadd.f32 %v1386, %v1387
        %v1389 = vrot.slane %v1388, 1
        %v1390 = vadd.f32 %v1388, %v1389
        %v1391 = vsel %vm1257, %v1228, 0.0
        %v1392 = vrot.slane %v1391, 4
        %v1393 = vadd.f32 %v1391, %v1392
        %v1394 = vrot.slane %v1393, 2
        %v1395 = vadd.f32 %v1393, %v1394
        %v1396 = vrot.slane %v1395, 1
        %v1397 = vadd.f32 %v1395, %v1396
        %v1398 = vsel %vm1257, %v1229, 0.0
        %v1399 = vrot.slane %v1398, 4
        %v1400 = vadd.f32 %v1398, %v1399
        %v1401 = vrot.slane %v1400, 2
        %v1402 = vadd.f32 %v1400, %v1401
        %v1403 = vrot.slane %v1402, 1
        %v1404 = vadd.f32 %v1402, %v1403
        %v1405 = vsel %vm1257, %v1230, 0.0
        %v1406 = vrot.slane %v1405, 4
        %v1407 = vadd.f32 %v1405, %v1406
        %v1408 = vrot.slane %v1407, 2
        %v1409 = vadd.f32 %v1407, %v1408
        %v1410 = vrot.slane %v1409, 1
        %v1411 = vadd.f32 %v1409, %v1410
        %v1412 = vsel %vm1257, %v1231, 0.0
        %v1413 = vrot.slane %v1412, 4
        %v1414 = vadd.f32 %v1412, %v1413
        %v1415 = vrot.slane %v1414, 2
        %v1416 = vadd.f32 %v1414, %v1415
        %v1417 = vrot.slane %v1416, 1
        %v1418 = vadd.f32 %v1416, %v1417
        %v1419 = vsel %vm1257, %v1232, 0.0
        %v1420 = vrot.slane %v1419, 4
        %v1421 = vadd.f32 %v1419, %v1420
        %v1422 = vrot.slane %v1421, 2
        %v1423 = vadd.f32 %v1421, %v1422
        %v1424 = vrot.slane %v1423, 1
        %v1425 = vadd.f32 %v1423, %v1424
        %v1426 = vsel %vm1257, %v1233, 0.0
        %v1427 = vrot.slane %v1426, 4
        %v1428 = vadd.f32 %v1426, %v1427
        %v1429 = vrot.slane %v1428, 2
        %v1430 = vadd.f32 %v1428, %v1429
        %v1431 = vrot.slane %v1430, 1
        %v1432 = vadd.f32 %v1430, %v1431
        %v1433 = vsel %vm1257, %v1234, 0.0
        %v1434 = vrot.slane %v1433, 4
        %v1435 = vadd.f32 %v1433, %v1434
        %v1436 = vrot.slane %v1435, 2
        %v1437 = vadd.f32 %v1435, %v1436
        %v1438 = vrot.slane %v1437, 1
        %v1439 = vadd.f32 %v1437, %v1438
        %v1440 = vsel %vm1257, %v1235, 0.0
        %v1441 = vrot.slane %v1440, 4
        %v1442 = vadd.f32 %v1440, %v1441
        %v1443 = vrot.slane %v1442, 2
        %v1444 = vadd.f32 %v1442, %v1443
        %v1445 = vrot.slane %v1444, 1
        %v1446 = vadd.f32 %v1444, %v1445
        %v1447 = vsel %vm1257, %v1236, 0.0
        %v1448 = vrot.slane %v1447, 4
        %v1449 = vadd.f32 %v1447, %v1448
        %v1450 = vrot.slane %v1449, 2
        %v1451 = vadd.f32 %v1449, %v1450
        %v1452 = vrot.slane %v1451, 1
        %v1453 = vadd.f32 %v1451, %v1452
        %v1454 = vsel %vm1257, %v1237, 0.0
        %v1455 = vrot.slane %v1454, 4
        %v1456 = vadd.f32 %v1454, %v1455
        %v1457 = vrot.slane %v1456, 2
        %v1458 = vadd.f32 %v1456, %v1457
        %v1459 = vrot.slane %v1458, 1
        %v1460 = vadd.f32 %v1458, %v1459
        %v1461 = vsel %vm1257, %v1238, 0.0
        %v1462 = vrot.slane %v1461, 4
        %v1463 = vadd.f32 %v1461, %v1462
        %v1464 = vrot.slane %v1463, 2
        %v1465 = vadd.f32 %v1463, %v1464
        %v1466 = vrot.slane %v1465, 1
        %v1467 = vadd.f32 %v1465, %v1466
        %v1468 = vsel %vm1257, %v1239, 0.0
        %v1469 = vrot.slane %v1468, 4
        %v1470 = vadd.f32 %v1468, %v1469
        %v1471 = vrot.slane %v1470, 2
        %v1472 = vadd.f32 %v1470, %v1471
        %v1473 = vrot.slane %v1472, 1
        %v1474 = vadd.f32 %v1472, %v1473
        %v1475 = vsel %vm1257, %v1240, 0.0
        %v1476 = vrot.slane %v1475, 4
        %v1477 = vadd.f32 %v1475, %v1476
        %v1478 = vrot.slane %v1477, 2
        %v1479 = vadd.f32 %v1477, %v1478
        %v1480 = vrot.slane %v1479, 1
        %v1481 = vadd.f32 %v1479, %v1480
        %v1482 = vsel %vm1257, %v1241, 0.0
        %v1483 = vrot.slane %v1482, 4
        %v1484 = vadd.f32 %v1482, %v1483
        %v1485 = vrot.slane %v1484, 2
        %v1486 = vadd.f32 %v1484, %v1485
        %v1487 = vrot.slane %v1486, 1
        %v1488 = vadd.f32 %v1486, %v1487
        %v1489 = vsel %vm1257, %v1242, 0.0
        %v1490 = vrot.slane %v1489, 4
        %v1491 = vadd.f32 %v1489, %v1490
        %v1492 = vrot.slane %v1491, 2
        %v1493 = vadd.f32 %v1491, %v1492
        %v1494 = vrot.slane %v1493, 1
        %v1495 = vadd.f32 %v1493, %v1494
        %v1496 = vsel %vm1257, %v1243, 0.0
        %v1497 = vrot.slane %v1496, 4
        %v1498 = vadd.f32 %v1496, %v1497
        %v1499 = vrot.slane %v1498, 2
        %v1500 = vadd.f32 %v1498, %v1499
        %v1501 = vrot.slane %v1500, 1
        %v1502 = vadd.f32 %v1500, %v1501
        %v1503 = vsel %vm1257, %v1244, 0.0
        %v1504 = vrot.slane %v1503, 4
        %v1505 = vadd.f32 %v1503, %v1504
        %v1506 = vrot.slane %v1505, 2
        %v1507 = vadd.f32 %v1505, %v1506
        %v1508 = vrot.slane %v1507, 1
        %v1509 = vadd.f32 %v1507, %v1508
        %v1510 = vsel %vm1257, %v1245, 0.0
        %v1511 = vrot.slane %v1510, 4
        %v1512 = vadd.f32 %v1510, %v1511
        %v1513 = vrot.slane %v1512, 2
        %v1514 = vadd.f32 %v1512, %v1513
        %v1515 = vrot.slane %v1514, 1
        %v1516 = vadd.f32 %v1514, %v1515
        %v1517 = vsel %vm1257, %v1246, 0.0
        %v1518 = vrot.slane %v1517, 4
        %v1519 = vadd.f32 %v1517, %v1518
        %v1520 = vrot.slane %v1519, 2
        %v1521 = vadd.f32 %v1519, %v1520
        %v1522 = vrot.slane %v1521, 1
        %v1523 = vadd.f32 %v1521, %v1522
        %v1524 = vsel %vm1257, %v1247, 0.0
        %v1525 = vrot.slane %v1524, 4
        %v1526 = vadd.f32 %v1524, %v1525
        %v1527 = vrot.slane %v1526, 2
        %v1528 = vadd.f32 %v1526, %v1527
        %v1529 = vrot.slane %v1528, 1
        %v1530 = vadd.f32 %v1528, %v1529
        %v1531 = vsel %vm1257, %v1248, 0.0
        %v1532 = vrot.slane %v1531, 4
        %v1533 = vadd.f32 %v1531, %v1532
        %v1534 = vrot.slane %v1533, 2
        %v1535 = vadd.f32 %v1533, %v1534
        %v1536 = vrot.slane %v1535, 1
        %v1537 = vadd.f32 %v1535, %v1536
        %v1538 = vsel %vm1257, %v1249, 0.0
        %v1539 = vrot.slane %v1538, 4
        %v1540 = vadd.f32 %v1538, %v1539
        %v1541 = vrot.slane %v1540, 2
        %v1542 = vadd.f32 %v1540, %v1541
        %v1543 = vrot.slane %v1542, 1
        %v1544 = vadd.f32 %v1542, %v1543
        %v1545 = vsel %vm1257, %v1250, 0.0
        %v1546 = vrot.slane %v1545, 4
        %v1547 = vadd.f32 %v1545, %v1546
        %v1548 = vrot.slane %v1547, 2
        %v1549 = vadd.f32 %v1547, %v1548
        %v1550 = vrot.slane %v1549, 1
        %v1551 = vadd.f32 %v1549, %v1550
        %v1552 = vsel %vm1257, %v1251, 0.0
        %v1553 = vrot.slane %v1552, 4
        %v1554 = vadd.f32 %v1552, %v1553
        %v1555 = vrot.slane %v1554, 2
        %v1556 = vadd.f32 %v1554, %v1555
        %v1557 = vrot.slane %v1556, 1
        %v1558 = vadd.f32 %v1556, %v1557
        %v1559 = vsel %vm1257, %v1252, 0.0
        %v1560 = vrot.slane %v1559, 4
        %v1561 = vadd.f32 %v1559, %v1560
        %v1562 = vrot.slane %v1561, 2
        %v1563 = vadd.f32 %v1561, %v1562
        %v1564 = vrot.slane %v1563, 1
        %v1565 = vadd.f32 %v1563, %v1564
        %v1566 = vsel %vm1257, %v1253, 0.0
        %v1567 = vrot.slane %v1566, 4
        %v1568 = vadd.f32 %v1566, %v1567
        %v1569 = vrot.slane %v1568, 2
        %v1570 = vadd.f32 %v1568, %v1569
        %v1571 = vrot.slane %v1570, 1
        %v1572 = vadd.f32 %v1570, %v1571
        %v1573 = vsel %vm1257, %v1254, 0.0
        %v1574 = vrot.slane %v1573, 4
        %v1575 = vadd.f32 %v1573, %v1574
        %v1576 = vrot.slane %v1575, 2
        %v1577 = vadd.f32 %v1575, %v1576
        %v1578 = vrot.slane %v1577, 1
        %v1579 = vadd.f32 %v1577, %v1578
        %v1580 = vsel %vm1257, %v1255, 0.0
        %v1581 = vrot.slane %v1580, 4
        %v1582 = vadd.f32 %v1580, %v1581
        %v1583 = vrot.slane %v1582, 2
        %v1584 = vadd.f32 %v1582, %v1583
        %v1585 = vrot.slane %v1584, 1
        %v1586 = vadd.f32 %v1584, %v1585
        %v1587 = vsel %vm1257, %v1256, 0.0
        %v1588 = vrot.slane %v1587, 4
        %v1589 = vadd.f32 %v1587, %v1588
        %v1590 = vrot.slane %v1589, 2
        %v1591 = vadd.f32 %v1589, %v1590
        %v1592 = vrot.slane %v1591, 1
        %v1593 = vadd.f32 %v1591, %v1592
        %v1594 = vadd.f32 %v782, %v1264
        %v1595 = vadd.f32 %v788, %v1271
        %v1596 = vadd.f32 %v794, %v1278
        %v1597 = vadd.f32 %v800, %v1285
        %v1598 = vadd.f32 %v806, %v1292
        %v1599 = vadd.f32 %v812, %v1299
        %v1600 = vadd.f32 %v818, %v1306
        %v1601 = vadd.f32 %v824, %v1313
        %v1602 = vadd.f32 %v830, %v1320
        %v1603 = vadd.f32 %v836, %v1327
        %v1604 = vadd.f32 %v842, %v1334
        %v1605 = vadd.f32 %v848, %v1341
        %v1606 = vadd.f32 %v854, %v1348
        %v1607 = vadd.f32 %v860, %v1355
        %v1608 = vadd.f32 %v866, %v1362
        %v1609 = vadd.f32 %v872, %v1369
        %v1610 = vadd.f32 %v878, %v1376
        %v1611 = vadd.f32 %v884, %v1383
        %v1612 = vadd.f32 %v890, %v1390
        %v1613 = vadd.f32 %v896, %v1397
        %v1614 = vadd.f32 %v902, %v1404
        %v1615 = vadd.f32 %v908, %v1411
        %v1616 = vadd.f32 %v914, %v1418
        %v1617 = vadd.f32 %v920, %v1425
        %v1618 = vadd.f32 %v926, %v1432
        %v1619 = vadd.f32 %v932, %v1439
        %v1620 = vadd.f32 %v938, %v1446
        %v1621 = vadd.f32 %v944, %v1453
        %v1622 = vadd.f32 %v950, %v1460
        %v1623 = vadd.f32 %v956, %v1467
        %v1624 = vadd.f32 %v962, %v1474
        %v1625 = vadd.f32 %v968, %v1481
        %v1626 = vadd.f32 %v974, %v1488
        %v1627 = vadd.f32 %v980, %v1495
        %v1628 = vadd.f32 %v986, %v1502
        %v1629 = vadd.f32 %v992, %v1509
        %v1630 = vadd.f32 %v998, %v1516
        %v1631 = vadd.f32 %v1004, %v1523
        %v1632 = vadd.f32 %v1010, %v1530
        %v1633 = vadd.f32 %v1016, %v1537
        %v1634 = vadd.f32 %v1022, %v1544
        %v1635 = vadd.f32 %v1028, %v1551
        %v1636 = vadd.f32 %v1034, %v1558
        %v1637 = vadd.f32 %v1040, %v1565
        %v1638 = vadd.f32 %v1046, %v1572
        %v1639 = vadd.f32 %v1052, %v1579
        %v1640 = vadd.f32 %v1058, %v1586
        %v1641 = vadd.f32 %v1064, %v1593
        %v1642 = vmul.f32 %v1594, 0.083333336
        %v1643 = vmul.f32 %v1595, 0.083333336
        %v1644 = vmul.f32 %v1596, 0.083333336
        %v1645 = vmul.f32 %v1597, 0.083333336
        %v1646 = vmul.f32 %v1598, 0.083333336
        %v1647 = vmul.f32 %v1599, 0.083333336
        %v1648 = vmul.f32 %v1600, 0.083333336
        %v1649 = vmul.f32 %v1601, 0.083333336
        %v1650 = vmul.f32 %v1602, 0.083333336
        %v1651 = vmul.f32 %v1603, 0.083333336
        %v1652 = vmul.f32 %v1604, 0.083333336
        %v1653 = vmul.f32 %v1605, 0.083333336
        %v1654 = vmul.f32 %v1606, 0.083333336
        %v1655 = vmul.f32 %v1607, 0.083333336
        %v1656 = vmul.f32 %v1608, 0.083333336
        %v1657 = vmul.f32 %v1609, 0.083333336
        %v1658 = vmul.f32 %v1610, 0.083333336
        %v1659 = vmul.f32 %v1611, 0.083333336
        %v1660 = vmul.f32 %v1612, 0.083333336
        %v1661 = vmul.f32 %v1613, 0.083333336
        %v1662 = vmul.f32 %v1614, 0.083333336
        %v1663 = vmul.f32 %v1615, 0.083333336
        %v1664 = vmul.f32 %v1616, 0.083333336
        %v1665 = vmul.f32 %v1617, 0.083333336
        %v1666 = vmul.f32 %v1618, 0.083333336
        %v1667 = vmul.f32 %v1619, 0.083333336
        %v1668 = vmul.f32 %v1620, 0.083333336
        %v1669 = vmul.f32 %v1621, 0.083333336
        %v1670 = vmul.f32 %v1622, 0.083333336
        %v1671 = vmul.f32 %v1623, 0.083333336
        %v1672 = vmul.f32 %v1624, 0.083333336
        %v1673 = vmul.f32 %v1625, 0.083333336
        %v1674 = vmul.f32 %v1626, 0.083333336
        %v1675 = vmul.f32 %v1627, 0.083333336
        %v1676 = vmul.f32 %v1628, 0.083333336
        %v1677 = vmul.f32 %v1629, 0.083333336
        %v1678 = vmul.f32 %v1630, 0.083333336
        %v1679 = vmul.f32 %v1631, 0.083333336
        %v1680 = vmul.f32 %v1632, 0.083333336
        %v1681 = vmul.f32 %v1633, 0.083333336
        %v1682 = vmul.f32 %v1634, 0.083333336
        %v1683 = vmul.f32 %v1635, 0.083333336
        %v1684 = vmul.f32 %v1636, 0.083333336
        %v1685 = vmul.f32 %v1637, 0.083333336
        %v1686 = vmul.f32 %v1638, 0.083333336
        %v1687 = vmul.f32 %v1639, 0.083333336
        %v1688 = vmul.f32 %v1640, 0.083333336
        %v1689 = vmul.f32 %v1641, 0.083333336
        %v1738 = vcombine.low %v1642, %v1643
        %v1739 = vcombine.low %v1644, %v1645
        %v1741 = vunpack.c.l.s4 1983009808
        %v1742 = vunpack.c.0.s8 %v1741
        %v1743 = vlaneseq
        %v1744 = vshrl.u32 %v1743, 7
        %v1745 = vsub.s32 %v1742, %v1744
        %v1746 = vrot.slane %v1738, %v1745
        %v1748 = vunpack.c.l.s4 1983009808
        %v1749 = vunpack.c.0.s8 %v1748
        %v1750 = vlaneseq
        %v1751 = vshrl.u32 %v1750, 7
        %v1752 = vsub.s32 %v1749, %v1751
        %v1753 = vrot.slane %v1739, %v1752
        %v1754 = vcombine.low %v1746, %v1753
        %v1755 = vcombine.low %v1646, %v1647
        %v1756 = vcombine.low %v1648, %v1649
        %v1758 = vunpack.c.l.s4 1983009808
        %v1759 = vunpack.c.0.s8 %v1758
        %v1760 = vlaneseq
        %v1761 = vshrl.u32 %v1760, 7
        %v1762 = vsub.s32 %v1759, %v1761
        %v1763 = vrot.slane %v1755, %v1762
        %v1765 = vunpack.c.l.s4 1983009808
        %v1766 = vunpack.c.0.s8 %v1765
        %v1767 = vlaneseq
        %v1768 = vshrl.u32 %v1767, 7
        %v1769 = vsub.s32 %v1766, %v1768
        %v1770 = vrot.slane %v1756, %v1769
        %v1771 = vcombine.low %v1763, %v1770
        %v1772 = vcombine.low %v1650, %v1651
        %v1773 = vcombine.low %v1652, %v1653
        %v1775 = vunpack.c.l.s4 1983009808
        %v1776 = vunpack.c.0.s8 %v1775
        %v1777 = vlaneseq
        %v1778 = vshrl.u32 %v1777, 7
        %v1779 = vsub.s32 %v1776, %v1778
        %v1780 = vrot.slane %v1772, %v1779
        %v1782 = vunpack.c.l.s4 1983009808
        %v1783 = vunpack.c.0.s8 %v1782
        %v1784 = vlaneseq
        %v1785 = vshrl.u32 %v1784, 7
        %v1786 = vsub.s32 %v1783, %v1785
        %v1787 = vrot.slane %v1773, %v1786
        %v1788 = vcombine.low %v1780, %v1787
        %v1789 = vcombine.low %v1654, %v1655
        %v1790 = vcombine.low %v1656, %v1657
        %v1792 = vunpack.c.l.s4 1983009808
        %v1793 = vunpack.c.0.s8 %v1792
        %v1794 = vlaneseq
        %v1795 = vshrl.u32 %v1794, 7
        %v1796 = vsub.s32 %v1793, %v1795
        %v1797 = vrot.slane %v1789, %v1796
        %v1799 = vunpack.c.l.s4 1983009808
        %v1800 = vunpack.c.0.s8 %v1799
        %v1801 = vlaneseq
        %v1802 = vshrl.u32 %v1801, 7
        %v1803 = vsub.s32 %v1800, %v1802
        %v1804 = vrot.slane %v1790, %v1803
        %v1805 = vcombine.low %v1797, %v1804
        %v1806 = vcombine.low %v1658, %v1659
        %v1807 = vcombine.low %v1660, %v1661
        %v1809 = vunpack.c.l.s4 1983009808
        %v1810 = vunpack.c.0.s8 %v1809
        %v1811 = vlaneseq
        %v1812 = vshrl.u32 %v1811, 7
        %v1813 = vsub.s32 %v1810, %v1812
        %v1814 = vrot.slane %v1806, %v1813
        %v1816 = vunpack.c.l.s4 1983009808
        %v1817 = vunpack.c.0.s8 %v1816
        %v1818 = vlaneseq
        %v1819 = vshrl.u32 %v1818, 7
        %v1820 = vsub.s32 %v1817, %v1819
        %v1821 = vrot.slane %v1807, %v1820
        %v1822 = vcombine.low %v1814, %v1821
        %v1823 = vcombine.low %v1662, %v1663
        %v1824 = vcombine.low %v1664, %v1665
        %v1826 = vunpack.c.l.s4 1983009808
        %v1827 = vunpack.c.0.s8 %v1826
        %v1828 = vlaneseq
        %v1829 = vshrl.u32 %v1828, 7
        %v1830 = vsub.s32 %v1827, %v1829
        %v1831 = vrot.slane %v1823, %v1830
        %v1833 = vunpack.c.l.s4 1983009808
        %v1834 = vunpack.c.0.s8 %v1833
        %v1835 = vlaneseq
        %v1836 = vshrl.u32 %v1835, 7
        %v1837 = vsub.s32 %v1834, %v1836
        %v1838 = vrot.slane %v1824, %v1837
        %v1839 = vcombine.low %v1831, %v1838
        %v1840 = vcombine.low %v1666, %v1667
        %v1841 = vcombine.low %v1668, %v1669
        %v1843 = vunpack.c.l.s4 1983009808
        %v1844 = vunpack.c.0.s8 %v1843
        %v1845 = vlaneseq
        %v1846 = vshrl.u32 %v1845, 7
        %v1847 = vsub.s32 %v1844, %v1846
        %v1848 = vrot.slane %v1840, %v1847
        %v1850 = vunpack.c.l.s4 1983009808
        %v1851 = vunpack.c.0.s8 %v1850
        %v1852 = vlaneseq
        %v1853 = vshrl.u32 %v1852, 7
        %v1854 = vsub.s32 %v1851, %v1853
        %v1855 = vrot.slane %v1841, %v1854
        %v1856 = vcombine.low %v1848, %v1855
        %v1857 = vcombine.low %v1670, %v1671
        %v1858 = vcombine.low %v1672, %v1673
        %v1860 = vunpack.c.l.s4 1983009808
        %v1861 = vunpack.c.0.s8 %v1860
        %v1862 = vlaneseq
        %v1863 = vshrl.u32 %v1862, 7
        %v1864 = vsub.s32 %v1861, %v1863
        %v1865 = vrot.slane %v1857, %v1864
        %v1867 = vunpack.c.l.s4 1983009808
        %v1868 = vunpack.c.0.s8 %v1867
        %v1869 = vlaneseq
        %v1870 = vshrl.u32 %v1869, 7
        %v1871 = vsub.s32 %v1868, %v1870
        %v1872 = vrot.slane %v1858, %v1871
        %v1873 = vcombine.low %v1865, %v1872
        %v1874 = vcombine.low %v1674, %v1675
        %v1875 = vcombine.low %v1676, %v1677
        %v1877 = vunpack.c.l.s4 1983009808
        %v1878 = vunpack.c.0.s8 %v1877
        %v1879 = vlaneseq
        %v1880 = vshrl.u32 %v1879, 7
        %v1881 = vsub.s32 %v1878, %v1880
        %v1882 = vrot.slane %v1874, %v1881
        %v1884 = vunpack.c.l.s4 1983009808
        %v1885 = vunpack.c.0.s8 %v1884
        %v1886 = vlaneseq
        %v1887 = vshrl.u32 %v1886, 7
        %v1888 = vsub.s32 %v1885, %v1887
        %v1889 = vrot.slane %v1875, %v1888
        %v1890 = vcombine.low %v1882, %v1889
        %v1891 = vcombine.low %v1678, %v1679
        %v1892 = vcombine.low %v1680, %v1681
        %v1894 = vunpack.c.l.s4 1983009808
        %v1895 = vunpack.c.0.s8 %v1894
        %v1896 = vlaneseq
        %v1897 = vshrl.u32 %v1896, 7
        %v1898 = vsub.s32 %v1895, %v1897
        %v1899 = vrot.slane %v1891, %v1898
        %v1901 = vunpack.c.l.s4 1983009808
        %v1902 = vunpack.c.0.s8 %v1901
        %v1903 = vlaneseq
        %v1904 = vshrl.u32 %v1903, 7
        %v1905 = vsub.s32 %v1902, %v1904
        %v1906 = vrot.slane %v1892, %v1905
        %v1907 = vcombine.low %v1899, %v1906
        %v1908 = vcombine.low %v1682, %v1683
        %v1909 = vcombine.low %v1684, %v1685
        %v1911 = vunpack.c.l.s4 1983009808
        %v1912 = vunpack.c.0.s8 %v1911
        %v1913 = vlaneseq
        %v1914 = vshrl.u32 %v1913, 7
        %v1915 = vsub.s32 %v1912, %v1914
        %v1916 = vrot.slane %v1908, %v1915
        %v1918 = vunpack.c.l.s4 1983009808
        %v1919 = vunpack.c.0.s8 %v1918
        %v1920 = vlaneseq
        %v1921 = vshrl.u32 %v1920, 7
        %v1922 = vsub.s32 %v1919, %v1921
        %v1923 = vrot.slane %v1909, %v1922
        %v1924 = vcombine.low %v1916, %v1923
        %v1925 = vcombine.low %v1686, %v1687
        %v1926 = vcombine.low %v1688, %v1689
        %v1928 = vunpack.c.l.s4 1983009808
        %v1929 = vunpack.c.0.s8 %v1928
        %v1930 = vlaneseq
        %v1931 = vshrl.u32 %v1930, 7
        %v1932 = vsub.s32 %v1929, %v1931
        %v1933 = vrot.slane %v1925, %v1932
        %v1935 = vunpack.c.l.s4 1983009808
        %v1936 = vunpack.c.0.s8 %v1935
        %v1937 = vlaneseq
        %v1938 = vshrl.u32 %v1937, 7
        %v1939 = vsub.s32 %v1936, %v1938
        %v1940 = vrot.slane %v1926, %v1939
        %v1941 = vcombine.low %v1933, %v1940
        %vm1942 = vcmask 1044484
        %v1943 = vsel %vm1942, %v1754, %v1754
        %vm1944 = vcmask 1046534
        %v1945 = vsel %vm1944, %v1754, %v1943
        %v1946 = vrot.slane %v1856, 7
        %vm1947 = vcmask 1041409
        %v1948 = vsel %vm1947, %v1946, %v1945
        %vm1949 = vcmask 1043459
        %v1950 = vsel %vm1949, %v1946, %v1948
        %vm1951 = vcmask 1045509
        %v1952 = vsel %vm1951, %v1946, %v1950
        %vm1953 = vcmask 1047559
        %v1954 = vsel %vm1953, %v1946, %v1952
        %v1955 = vsel %vm1942, %v1771, %v1771
        %v1956 = vsel %vm1944, %v1771, %v1955
        %v1957 = vrot.slane %v1873, 7
        %v1958 = vsel %vm1947, %v1957, %v1956
        %v1959 = vsel %vm1949, %v1957, %v1958
        %v1960 = vsel %vm1951, %v1957, %v1959
        %v1961 = vsel %vm1953, %v1957, %v1960
        %v1962 = vsel %vm1942, %v1788, %v1788
        %v1963 = vsel %vm1944, %v1788, %v1962
        %v1964 = vrot.slane %v1890, 7
        %v1965 = vsel %vm1947, %v1964, %v1963
        %v1966 = vsel %vm1949, %v1964, %v1965
        %v1967 = vsel %vm1951, %v1964, %v1966
        %v1968 = vsel %vm1953, %v1964, %v1967
        %v1969 = vsel %vm1942, %v1805, %v1805
        %v1970 = vsel %vm1944, %v1805, %v1969
        %v1971 = vrot.slane %v1907, 7
        %v1972 = vsel %vm1947, %v1971, %v1970
        %v1973 = vsel %vm1949, %v1971, %v1972
        %v1974 = vsel %vm1951, %v1971, %v1973
        %v1975 = vsel %vm1953, %v1971, %v1974
        %v1976 = vsel %vm1942, %v1822, %v1822
        %v1977 = vsel %vm1944, %v1822, %v1976
        %v1978 = vrot.slane %v1924, 7
        %v1979 = vsel %vm1947, %v1978, %v1977
        %v1980 = vsel %vm1949, %v1978, %v1979
        %v1981 = vsel %vm1951, %v1978, %v1980
        %v1982 = vsel %vm1953, %v1978, %v1981
        %v1983 = vsel %vm1942, %v1839, %v1839
        %v1984 = vsel %vm1944, %v1839, %v1983
        %v1985 = vrot.slane %v1941, 7
        %v1986 = vsel %vm1947, %v1985, %v1984
        %v1987 = vsel %vm1949, %v1985, %v1986
        %v1988 = vsel %vm1951, %v1985, %v1987
        %v1989 = vsel %vm1953, %v1985, %v1988
        %1996 = vst [vmem:[%s581] sm:$0xff] %v1954
        %1997 = vst [vmem:[%s581 + $0x8] sm:$0xff] %v1961
        %1998 = vst [vmem:[%s581 + $0x10] sm:$0xff] %v1968
        %1999 = vst [vmem:[%s581 + $0x18] sm:$0xff] %v1975
        %2000 = vst [vmem:[%s581 + $0x20] sm:$0xff] %v1982
        %2001 = vst [vmem:[%s581 + $0x28] sm:$0xff] %v1989
        %s2002 = sand.u32 %s76, 1
        %s2003 = scalar_lea.sflag [#allocation5], %s2002
        %s2004 = sand.u32 %s76, 1
        %s2005 = smul.addr %s2004, 48
        %s2006 = scalar_lea.vmem [#allocation4], %s2005
        // Predicated region
        $region75: #{tpu_custom_call.1} parent=65 // pred_check
          %p2007 = pneg %p86
        $region76: #{tpu_custom_call.1} parent=65 // pred_check_branch
          %2009 = sbr.rel (%p2007) target = $region78
        $region77: #{tpu_custom_call.1} parent=65 // pred_region
          %s2010 = smul.u32 24, %s16
          %s2012 = ssub.s32 768, 768
          %2013 = vsyncadd %s2003, %s2012
          %s2014 = smul.addr %s2010, 32
          %s2015 = scalar_lea.hbm %s2, %s2014
          %s2017 = sshll.u32 %s2006, 4
          %s2018 = int_to_ptr.vmem [resolvable:$true] %s2017
          %2020 = dma.vmem_to_hbm [thread:$0]  %s2018, 768, %s2015, %s2003
        $region78: #{tpu_custom_call.1} parent=65 // pred_fallthru
          _
      $region66: #{tpu_custom_call.1} parent=5 // pred_fallthru
        _
      %p2021 = scmp.le.s32.totalorder 2, %s11
      // Predicated region
      $region79: #{tpu_custom_call.1} parent=5 // pred_check
        %p2022 = pneg %p2021
      $region80: #{tpu_custom_call.1} parent=5 // pred_check_branch
        %2024 = sbr.rel (%p2022) target = $region82
      $region81: #{tpu_custom_call.1} parent=5 // pred_region
        %s2025 = ssub.s32 %s11, 2
        // Predicated region
        $region83: #{tpu_custom_call.1} parent=81 // pred_check
          %p2026 = pneg %p92
        $region84: #{tpu_custom_call.1} parent=81 // pred_check_branch
          %2028 = sbr.rel (%p2026) target = $region86
        $region85: #{tpu_custom_call.1} parent=81 // pred_region
          %s2029 = sand.u32 %s77, 1
          %s2030 = scalar_lea.sflag [#allocation5], %s2029
          %s2031 = sand.u32 %s77, 1
          %s2032 = smul.addr %s2031, 48
          %s2033 = scalar_lea.vmem [#allocation4], %s2032
          %2034 = dma.done %s2030, 768
        $region86: #{tpu_custom_call.1} parent=81 // pred_fallthru
          _
      $region82: #{tpu_custom_call.1} parent=5 // pred_fallthru
        _
    $region6: #{tpu_custom_call.1} parent=1 // loop_footer
      %s15 = sadd.s32 1, %s11
    $region7: #{tpu_custom_call.1} parent=1 // loop_footer_branch
      %10 = sbr.rel target = $region3
    $region8: #{tpu_custom_call.1} parent=1 // loop_exit
      _
    %2035 = vsyncpa [#allocation5], 1
    %s2036 = scalar_lea.sflag [#allocation5], 1
    %2037 = vsyncpa %s2036, 1

</llo_original>
